<compile_context>
chip_gen: v7x
topology: tpu7x:2x2x1
jax: 0.10.0
libtpu: 0.0.40
codegen_flags: <defaults>
</compile_context>

<pallas_src>
import functools
import math

import numpy as np

import jax
import jax.numpy as jnp
from jax.experimental import pallas as pl
from jax.experimental.pallas import tpu as pltpu


# ----------------------------------------------------------------------------
# Trace-time geometry: im2col gather indices + pooling-friendly row permutation
# ----------------------------------------------------------------------------
def _build_geometry(h_in, w_in, ksize=4, pad=4):
    h1 = h_in + 2 * pad - ksize + 1            # conv1 output spatial (21 for 16)
    w1 = w_in + 2 * pad - ksize + 1
    h3, w3 = (h1 // 2) // 2, (w1 // 2) // 2    # spatial after both 2x2 pools (5, 5)
    n_final = h3 * w3                          # rows averaged by global avg pool (25)
    n2_pad = -(-n_final // 8) * 8              # pool-2 slab, sublane aligned   (32)
    q_pad = 4 * n2_pad                         # pool-1 slab                    (128)
    r_pad = 4 * q_pad                          # rows fed to conv1/conv2        (512)

    # Row r of the patch tensor corresponds to conv1-output position
    # (h_of[r], w_of[r]).  Ordering: pool-1 parity class (4 slabs of q_pad rows),
    # then pool-2 parity class (4 blocks of n2_pad rows), then final (a, b)
    # position row-major.  Positions the max-pools drop are never emitted; pad
    # rows duplicate position (0, 0) and are ignored downstream.
    h_of = np.zeros(r_pad, np.int32)
    w_of = np.zeros(r_pad, np.int32)
    for hh in range(4 * h3):
        for ww in range(4 * w3):
            i, j = hh // 2, ww // 2
            a, b = i // 2, j // 2
            p1 = 2 * (hh % 2) + (ww % 2)
            p2 = 2 * (i % 2) + (j % 2)
            r = p1 * q_pad + p2 * n2_pad + a * w3 + b
            h_of[r] = hh
            w_of[r] = ww

    koff_h = np.repeat(np.arange(ksize), ksize)      # kh-major, matches HWIO flatten
    koff_w = np.tile(np.arange(ksize), ksize)
    gh = h_of[:, None] + koff_h[None, :]             # (r_pad, 16) rows into padded input
    gw = w_of[:, None] + koff_w[None, :]
    return gh, gw, n_final, n2_pad, q_pad, r_pad


# ----------------------------------------------------------------------------
# The single fused kernel: one grid step == one image, everything VMEM-resident
# ----------------------------------------------------------------------------
def _classifier_kernel(p_ref, w1_ref, b1_ref, w2_ref, b2_ref, w3_ref, b3_ref,
                       w4_ref, b4_ref, wf_ref, bf_ref, o_ref,
                       *, n_final, n2_pad, q_pad):
    def mm_bias_leaky(x, w_r, b_r):
        acc = jnp.dot(x, w_r[...], preferred_element_type=jnp.float32) + b_r[...]
        return jnp.maximum(acc, 0.1 * acc)           # LeakyReLU(0.1)

    def maxpool4(x, slab):
        # 2x2 stride-2 max-pool == elementwise max of 4 contiguous row slabs
        # (row order was permuted in the wrapper so each parity class is a slab).
        return jnp.maximum(jnp.maximum(x[0:slab], x[slab:2 * slab]),
                           jnp.maximum(x[2 * slab:3 * slab], x[3 * slab:4 * slab]))

    h = mm_bias_leaky(p_ref[0], w1_ref, b1_ref)      # conv1 4x4 via im2col  (R, 32)
    h = mm_bias_leaky(h, w2_ref, b2_ref)             # conv2 1x1             (R, 64)
    h = maxpool4(h, q_pad)                           # maxpool 2x2           (q, 64)
    h = mm_bias_leaky(h, w3_ref, b3_ref)             # conv3 1x1             (q, 128)
    h = maxpool4(h, n2_pad)                          # maxpool 2x2           (n2, 128)
    h = mm_bias_leaky(h, w4_ref, b4_ref)             # conv4 1x1             (n2, 256)

    # Global average pool over the n_final valid spatial positions.
    pooled = jnp.sum(h[0:n_final], axis=0, keepdims=True) * (1.0 / n_final)   # (1, 256)
    y = jnp.dot(pooled, wf_ref[...], preferred_element_type=jnp.float32) + bf_ref[...]
    y = jnp.maximum(y, 0.0)                          # ReLU
    s = jnp.sum(y, axis=1, keepdims=True)            # row sum (1, 1)
    o_ref[0] = y / s                                 # x / sum(x, dim=1)  (NaN if 0, as torch)


# ----------------------------------------------------------------------------
# Wrapper: NCHW->NHWC, pad, one im2col gather, then one pallas_call
# ----------------------------------------------------------------------------
def classifier_forward(x_nchw, p):
    bsz, cin, h_in, w_in = x_nchw.shape
    gh, gw, n_final, n2_pad, q_pad, r_pad = _build_geometry(h_in, w_in)
    kdim = 16 * cin                                  # 4*4*cin patch width (64)

    x = jnp.transpose(x_nchw, (0, 2, 3, 1))                  # NCHW -> NHWC
    xp = jnp.pad(x, ((0, 0), (4, 4), (4, 4), (0, 0)))        # conv1 padding=4
    patches = xp[:, gh, gw, :].reshape(bsz, r_pad, kdim)     # im2col, permuted rows

    kernel = functools.partial(_classifier_kernel, n_final=n_final,
                               n2_pad=n2_pad, q_pad=q_pad)
    out = pl.pallas_call(
        kernel,
        out_shape=jax.ShapeDtypeStruct((bsz, 1, 3), jnp.float32),
        grid=(bsz,),
        in_specs=[
            pl.BlockSpec((1, r_pad, kdim), lambda i: (i, 0, 0)),   # patches (per image)
            pl.BlockSpec((kdim, 32), lambda i: (0, 0)),            # conv1 w (HWIO flat)
            pl.BlockSpec((1, 32), lambda i: (0, 0)),               # conv1 b
            pl.BlockSpec((32, 64), lambda i: (0, 0)),              # conv2 w
            pl.BlockSpec((1, 64), lambda i: (0, 0)),               # conv2 b
            pl.BlockSpec((64, 128), lambda i: (0, 0)),             # conv3 w
            pl.BlockSpec((1, 128), lambda i: (0, 0)),              # conv3 b
            pl.BlockSpec((128, 256), lambda i: (0, 0)),            # conv4 w
            pl.BlockSpec((1, 256), lambda i: (0, 0)),              # conv4 b
            pl.BlockSpec((256, 3), lambda i: (0, 0)),              # fc w
            pl.BlockSpec((1, 3), lambda i: (0, 0)),                # fc b
        ],
        out_specs=pl.BlockSpec((1, 1, 3), lambda i: (i, 0, 0)),
        compiler_params=pltpu.CompilerParams(
            dimension_semantics=("parallel",)),      # batch shards across TCs on v7x
    )(
        patches,
        p["conv1_w"].reshape(kdim, 32), p["conv1_b"].reshape(1, 32),
        p["conv2_w"], p["conv2_b"].reshape(1, 64),
        p["conv3_w"], p["conv3_b"].reshape(1, 128),
        p["conv4_w"], p["conv4_b"].reshape(1, 256),
        p["fc_w"], p["fc_b"].reshape(1, 3),
    )
    return out.reshape(bsz, 3)


# ----------------------------------------------------------------------------
# Deterministic synthetic parameter init (PyTorch-default-like uniform bounds)
# ----------------------------------------------------------------------------
def init_params(key):
    ks = jax.random.split(key, 10)

    def u(k, shape, fan_in):
        bound = 1.0 / math.sqrt(fan_in)
        return jax.random.uniform(k, shape, jnp.float32, -bound, bound)

    return {
        "conv1_w": u(ks[0], (4, 4, 4, 32), 4 * 4 * 4),  # HWIO
        "conv1_b": u(ks[1], (32,), 4 * 4 * 4),
        "conv2_w": u(ks[2], (32, 64), 32),
        "conv2_b": u(ks[3], (64,), 32),
        "conv3_w": u(ks[4], (64, 128), 64),
        "conv3_b": u(ks[5], (128,), 64),
        "conv4_w": u(ks[6], (128, 256), 128),
        "conv4_b": u(ks[7], (256,), 128),
        "fc_w": u(ks[8], (256, 3), 256),
        "fc_b": u(ks[9], (3,), 256),
    }


if __name__ == "__main__":
    key = jax.random.PRNGKey(0)
    kx, kp = jax.random.split(key)
    x = jax.random.normal(kx, (2, 4, 16, 16), jnp.float32)  # NCHW like PyTorch
    params = init_params(kp)

    out = jax.jit(classifier_forward)(x, params)
    jax.block_until_ready(out)
    assert out.shape == (2, 3)
    print("KERNEL_OK")
</pallas_src>

<mosaic_0001>
module attributes {stable_mosaic.version = 11 : i64} {
  func.func @_classifier_kernel(%arg0: i32, %arg1: memref<1x512x64xf32, #tpu.memory_space<vmem>>, %arg2: memref<64x32xf32, #tpu.memory_space<vmem>>, %arg3: memref<1x32xf32, #tpu.memory_space<vmem>>, %arg4: memref<32x64xf32, #tpu.memory_space<vmem>>, %arg5: memref<1x64xf32, #tpu.memory_space<vmem>>, %arg6: memref<64x128xf32, #tpu.memory_space<vmem>>, %arg7: memref<1x128xf32, #tpu.memory_space<vmem>>, %arg8: memref<128x256xf32, #tpu.memory_space<vmem>>, %arg9: memref<1x256xf32, #tpu.memory_space<vmem>>, %arg10: memref<256x3xf32, #tpu.memory_space<vmem>>, %arg11: memref<1x3xf32, #tpu.memory_space<vmem>>, %arg12: memref<1x1x3xf32, #tpu.memory_space<vmem>>) attributes {dimension_semantics = [#tpu.dimension_semantics<parallel>], iteration_bounds = array<i64: 2>, scalar_prefetch = 0 : i64, scratch_operands = 0 : i64, tpu.core_type = #tpu.core_type<tc>, window_params = [{transform_indices = @transform_0, window_bounds = array<i64: 1, 512, 64>}, {pipeline_mode = #tpu.pipeline_mode<synchronous>, transform_indices = @transform_1, window_bounds = array<i64: 64, 32>}, {pipeline_mode = #tpu.pipeline_mode<synchronous>, transform_indices = @transform_2, window_bounds = array<i64: 1, 32>}, {pipeline_mode = #tpu.pipeline_mode<synchronous>, transform_indices = @transform_3, window_bounds = array<i64: 32, 64>}, {pipeline_mode = #tpu.pipeline_mode<synchronous>, transform_indices = @transform_4, window_bounds = array<i64: 1, 64>}, {pipeline_mode = #tpu.pipeline_mode<synchronous>, transform_indices = @transform_5, window_bounds = array<i64: 64, 128>}, {pipeline_mode = #tpu.pipeline_mode<synchronous>, transform_indices = @transform_6, window_bounds = array<i64: 1, 128>}, {pipeline_mode = #tpu.pipeline_mode<synchronous>, transform_indices = @transform_7, window_bounds = array<i64: 128, 256>}, {pipeline_mode = #tpu.pipeline_mode<synchronous>, transform_indices = @transform_8, window_bounds = array<i64: 1, 256>}, {pipeline_mode = #tpu.pipeline_mode<synchronous>, transform_indices = @transform_9, window_bounds = array<i64: 256, 3>}, {pipeline_mode = #tpu.pipeline_mode<synchronous>, transform_indices = @transform_10, window_bounds = array<i64: 1, 3>}, {transform_indices = @transform_11, window_bounds = array<i64: 1, 1, 3>}]} {
    %c0 = arith.constant 0 : index
    %c0_0 = arith.constant 0 : index
    %c0_1 = arith.constant 0 : index
    %0 = vector.load %arg1[%c0, %c0_0, %c0_1] : memref<1x512x64xf32, #tpu.memory_space<vmem>>, vector<1x512x64xf32>
    %1 = vector.shape_cast %0 : vector<1x512x64xf32> to vector<512x64xf32>
    %c0_2 = arith.constant 0 : index
    %c0_3 = arith.constant 0 : index
    %2 = vector.load %arg2[%c0_2, %c0_3] : memref<64x32xf32, #tpu.memory_space<vmem>>, vector<64x32xf32>
    %cst = arith.constant dense<0.000000e+00> : vector<512x32xf32>
    %3 = tpu.matmul %1, %2, %cst {dimension_numbers = #tpu.dot_dimension_numbers<[1], [0], [0], [1], [0, 0, 1, 1], [], []>} : vector<512x64xf32>, vector<64x32xf32>, vector<512x32xf32> -> vector<512x32xf32>
    %c0_4 = arith.constant 0 : index
    %c0_5 = arith.constant 0 : index
    %4 = vector.load %arg3[%c0_4, %c0_5] : memref<1x32xf32, #tpu.memory_space<vmem>>, vector<1x32xf32>
    %5 = vector.broadcast %4 : vector<1x32xf32> to vector<512x32xf32>
    %6 = arith.addf %3, %5 : vector<512x32xf32>
    %cst_6 = arith.constant 1.000000e-01 : f32
    %7 = vector.broadcast %cst_6 : f32 to vector<512x32xf32>
    %8 = arith.mulf %7, %6 : vector<512x32xf32>
    %9 = arith.maximumf %6, %8 : vector<512x32xf32>
    %c0_7 = arith.constant 0 : index
    %c0_8 = arith.constant 0 : index
    %10 = vector.load %arg4[%c0_7, %c0_8] : memref<32x64xf32, #tpu.memory_space<vmem>>, vector<32x64xf32>
    %cst_9 = arith.constant dense<0.000000e+00> : vector<512x64xf32>
    %11 = tpu.matmul %9, %10, %cst_9 {dimension_numbers = #tpu.dot_dimension_numbers<[1], [0], [0], [1], [0, 0, 1, 1], [], []>} : vector<512x32xf32>, vector<32x64xf32>, vector<512x64xf32> -> vector<512x64xf32>
    %c0_10 = arith.constant 0 : index
    %c0_11 = arith.constant 0 : index
    %12 = vector.load %arg5[%c0_10, %c0_11] : memref<1x64xf32, #tpu.memory_space<vmem>>, vector<1x64xf32>
    %13 = vector.broadcast %12 : vector<1x64xf32> to vector<512x64xf32>
    %14 = arith.addf %11, %13 : vector<512x64xf32>
    %cst_12 = arith.constant 1.000000e-01 : f32
    %15 = vector.broadcast %cst_12 : f32 to vector<512x64xf32>
    %16 = arith.mulf %15, %14 : vector<512x64xf32>
    %17 = arith.maximumf %14, %16 : vector<512x64xf32>
    %18 = vector.extract_strided_slice %17 {offsets = [0, 0], sizes = [128, 64], strides = [1, 1]} : vector<512x64xf32> to vector<128x64xf32>
    %19 = vector.extract_strided_slice %17 {offsets = [128, 0], sizes = [128, 64], strides = [1, 1]} : vector<512x64xf32> to vector<128x64xf32>
    %20 = arith.maximumf %18, %19 : vector<128x64xf32>
    %21 = vector.extract_strided_slice %17 {offsets = [256, 0], sizes = [128, 64], strides = [1, 1]} : vector<512x64xf32> to vector<128x64xf32>
    %22 = vector.extract_strided_slice %17 {offsets = [384, 0], sizes = [128, 64], strides = [1, 1]} : vector<512x64xf32> to vector<128x64xf32>
    %23 = arith.maximumf %21, %22 : vector<128x64xf32>
    %24 = arith.maximumf %20, %23 : vector<128x64xf32>
    %c0_13 = arith.constant 0 : index
    %c0_14 = arith.constant 0 : index
    %25 = vector.load %arg6[%c0_13, %c0_14] : memref<64x128xf32, #tpu.memory_space<vmem>>, vector<64x128xf32>
    %cst_15 = arith.constant dense<0.000000e+00> : vector<128x128xf32>
    %26 = tpu.matmul %24, %25, %cst_15 {dimension_numbers = #tpu.dot_dimension_numbers<[1], [0], [0], [1], [0, 0, 1, 1], [], []>} : vector<128x64xf32>, vector<64x128xf32>, vector<128x128xf32> -> vector<128x128xf32>
    %c0_16 = arith.constant 0 : index
    %c0_17 = arith.constant 0 : index
    %27 = vector.load %arg7[%c0_16, %c0_17] : memref<1x128xf32, #tpu.memory_space<vmem>>, vector<1x128xf32>
    %28 = vector.broadcast %27 : vector<1x128xf32> to vector<128x128xf32>
    %29 = arith.addf %26, %28 : vector<128x128xf32>
    %cst_18 = arith.constant 1.000000e-01 : f32
    %30 = vector.broadcast %cst_18 : f32 to vector<128x128xf32>
    %31 = arith.mulf %30, %29 : vector<128x128xf32>
    %32 = arith.maximumf %29, %31 : vector<128x128xf32>
    %33 = vector.extract_strided_slice %32 {offsets = [0, 0], sizes = [32, 128], strides = [1, 1]} : vector<128x128xf32> to vector<32x128xf32>
    %34 = vector.extract_strided_slice %32 {offsets = [32, 0], sizes = [32, 128], strides = [1, 1]} : vector<128x128xf32> to vector<32x128xf32>
    %35 = arith.maximumf %33, %34 : vector<32x128xf32>
    %36 = vector.extract_strided_slice %32 {offsets = [64, 0], sizes = [32, 128], strides = [1, 1]} : vector<128x128xf32> to vector<32x128xf32>
    %37 = vector.extract_strided_slice %32 {offsets = [96, 0], sizes = [32, 128], strides = [1, 1]} : vector<128x128xf32> to vector<32x128xf32>
    %38 = arith.maximumf %36, %37 : vector<32x128xf32>
    %39 = arith.maximumf %35, %38 : vector<32x128xf32>
    %c0_19 = arith.constant 0 : index
    %c0_20 = arith.constant 0 : index
    %40 = vector.load %arg8[%c0_19, %c0_20] : memref<128x256xf32, #tpu.memory_space<vmem>>, vector<128x256xf32>
    %cst_21 = arith.constant dense<0.000000e+00> : vector<32x256xf32>
    %41 = tpu.matmul %39, %40, %cst_21 {dimension_numbers = #tpu.dot_dimension_numbers<[1], [0], [0], [1], [0, 0, 1, 1], [], []>} : vector<32x128xf32>, vector<128x256xf32>, vector<32x256xf32> -> vector<32x256xf32>
    %c0_22 = arith.constant 0 : index
    %c0_23 = arith.constant 0 : index
    %42 = vector.load %arg9[%c0_22, %c0_23] : memref<1x256xf32, #tpu.memory_space<vmem>>, vector<1x256xf32>
    %43 = vector.broadcast %42 : vector<1x256xf32> to vector<32x256xf32>
    %44 = arith.addf %41, %43 : vector<32x256xf32>
    %cst_24 = arith.constant 1.000000e-01 : f32
    %45 = vector.broadcast %cst_24 : f32 to vector<32x256xf32>
    %46 = arith.mulf %45, %44 : vector<32x256xf32>
    %47 = arith.maximumf %44, %46 : vector<32x256xf32>
    %48 = vector.extract_strided_slice %47 {offsets = [0, 0], sizes = [25, 256], strides = [1, 1]} : vector<32x256xf32> to vector<25x256xf32>
    %cst_25 = arith.constant dense<0.000000e+00> : vector<256xf32>
    %49 = vector.multi_reduction <add>, %48, %cst_25 [0] : vector<25x256xf32> to vector<256xf32>
    %50 = vector.shape_cast %49 : vector<256xf32> to vector<1x256xf32>
    %cst_26 = arith.constant 4.000000e-02 : f32
    %51 = vector.broadcast %cst_26 : f32 to vector<1x256xf32>
    %52 = arith.mulf %50, %51 : vector<1x256xf32>
    %c0_27 = arith.constant 0 : index
    %c0_28 = arith.constant 0 : index
    %53 = vector.load %arg10[%c0_27, %c0_28] : memref<256x3xf32, #tpu.memory_space<vmem>>, vector<256x3xf32>
    %cst_29 = arith.constant dense<0.000000e+00> : vector<1x3xf32>
    %54 = tpu.matmul %52, %53, %cst_29 {dimension_numbers = #tpu.dot_dimension_numbers<[1], [0], [0], [1], [0, 0, 1, 1], [], []>} : vector<1x256xf32>, vector<256x3xf32>, vector<1x3xf32> -> vector<1x3xf32>
    %c0_30 = arith.constant 0 : index
    %c0_31 = arith.constant 0 : index
    %55 = vector.load %arg11[%c0_30, %c0_31] : memref<1x3xf32, #tpu.memory_space<vmem>>, vector<1x3xf32>
    %56 = arith.addf %54, %55 : vector<1x3xf32>
    %cst_32 = arith.constant 0.000000e+00 : f32
    %57 = vector.broadcast %cst_32 : f32 to vector<1x3xf32>
    %58 = arith.maximumf %56, %57 : vector<1x3xf32>
    %cst_33 = arith.constant dense<0.000000e+00> : vector<1xf32>
    %59 = vector.multi_reduction <add>, %58, %cst_33 [1] : vector<1x3xf32> to vector<1xf32>
    %60 = vector.shape_cast %59 : vector<1xf32> to vector<1x1xf32>
    %61 = vector.broadcast %60 : vector<1x1xf32> to vector<1x3xf32>
    %62 = arith.divf %58, %61 : vector<1x3xf32>
    %c0_34 = arith.constant 0 : index
    %c0_35 = arith.constant 0 : index
    %c0_36 = arith.constant 0 : index
    %63 = vector.load %arg12[%c0_34, %c0_35, %c0_36] : memref<1x1x3xf32, #tpu.memory_space<vmem>>, vector<1x1x3xf32>
    %64 = vector.shape_cast %63 : vector<1x1x3xf32> to vector<1x3xf32>
    %65 = vector.shape_cast %62 : vector<1x3xf32> to vector<1x1x3xf32>
    tpu.vector_store %arg12[%c0_34, %c0_35, %c0_36], %65 {strides = array<i32>} : memref<1x1x3xf32, #tpu.memory_space<vmem>>, vector<1x1x3xf32>,
    return
  }
  func.func @transform_0(%arg0: i32) -> (i32, i32, i32) {
    %c0_i32 = arith.constant 0 : i32
    %c0_i32_0 = arith.constant 0 : i32
    %c0_i32_1 = arith.constant 0 : i32
    return %arg0, %c0_i32, %c0_i32_0 : i32, i32, i32
  }
  func.func @transform_1(%arg0: i32) -> (i32, i32) {
    %c0_i32 = arith.constant 0 : i32
    %c0_i32_0 = arith.constant 0 : i32
    %c0_i32_1 = arith.constant 0 : i32
    return %c0_i32, %c0_i32_0 : i32, i32
  }
  func.func @transform_2(%arg0: i32) -> (i32, i32) {
    %c0_i32 = arith.constant 0 : i32
    %c0_i32_0 = arith.constant 0 : i32
    %c0_i32_1 = arith.constant 0 : i32
    return %c0_i32, %c0_i32_0 : i32, i32
  }
  func.func @transform_3(%arg0: i32) -> (i32, i32) {
    %c0_i32 = arith.constant 0 : i32
    %c0_i32_0 = arith.constant 0 : i32
    %c0_i32_1 = arith.constant 0 : i32
    return %c0_i32, %c0_i32_0 : i32, i32
  }
  func.func @transform_4(%arg0: i32) -> (i32, i32) {
    %c0_i32 = arith.constant 0 : i32
    %c0_i32_0 = arith.constant 0 : i32
    %c0_i32_1 = arith.constant 0 : i32
    return %c0_i32, %c0_i32_0 : i32, i32
  }
  func.func @transform_5(%arg0: i32) -> (i32, i32) {
    %c0_i32 = arith.constant 0 : i32
    %c0_i32_0 = arith.constant 0 : i32
    %c0_i32_1 = arith.constant 0 : i32
    return %c0_i32, %c0_i32_0 : i32, i32
  }
  func.func @transform_6(%arg0: i32) -> (i32, i32) {
    %c0_i32 = arith.constant 0 : i32
    %c0_i32_0 = arith.constant 0 : i32
    %c0_i32_1 = arith.constant 0 : i32
    return %c0_i32, %c0_i32_0 : i32, i32
  }
  func.func @transform_7(%arg0: i32) -> (i32, i32) {
    %c0_i32 = arith.constant 0 : i32
    %c0_i32_0 = arith.constant 0 : i32
    %c0_i32_1 = arith.constant 0 : i32
    return %c0_i32, %c0_i32_0 : i32, i32
  }
  func.func @transform_8(%arg0: i32) -> (i32, i32) {
    %c0_i32 = arith.constant 0 : i32
    %c0_i32_0 = arith.constant 0 : i32
    %c0_i32_1 = arith.constant 0 : i32
    return %c0_i32, %c0_i32_0 : i32, i32
  }
  func.func @transform_9(%arg0: i32) -> (i32, i32) {
    %c0_i32 = arith.constant 0 : i32
    %c0_i32_0 = arith.constant 0 : i32
    %c0_i32_1 = arith.constant 0 : i32
    return %c0_i32, %c0_i32_0 : i32, i32
  }
  func.func @transform_10(%arg0: i32) -> (i32, i32) {
    %c0_i32 = arith.constant 0 : i32
    %c0_i32_0 = arith.constant 0 : i32
    %c0_i32_1 = arith.constant 0 : i32
    return %c0_i32, %c0_i32_0 : i32, i32
  }
  func.func @transform_11(%arg0: i32) -> (i32, i32, i32) {
    %c0_i32 = arith.constant 0 : i32
    %c0_i32_0 = arith.constant 0 : i32
    %c0_i32_1 = arith.constant 0 : i32
    return %arg0, %c0_i32, %c0_i32_0 : i32, i32, i32
  }
}

</mosaic_0001>

<llo_original>
// kernel: classifier_forward.1
$region0: #{classifier_forward.1}
  #allocation0 [shape = 'u32[]', space=smem, size = 0x4, offset = 0x4, fixed_abs, tag = 'smem constant byte address 0x4 - core index']
  #allocation1 [shape = 'u32[144,128]{1,0:T(1,128)}', space=vmem, size = 0x12000, scoped, tag = 'internal scratch']
  %s0 = inlined_call_operand.vmem [shape: f32[2,512,64], index: 0, kind: input, shape index: {}]
  %s1 = inlined_call_operand.vmem [shape: f32[64,32], index: 1, kind: input, shape index: {}]
  %s2 = inlined_call_operand.vmem [shape: f32[1,32], index: 2, kind: input, shape index: {}]
  %s3 = inlined_call_operand.vmem [shape: f32[32,64], index: 3, kind: input, shape index: {}]
  %s4 = inlined_call_operand.vmem [shape: f32[1,64], index: 4, kind: input, shape index: {}]
  %s5 = inlined_call_operand.vmem [shape: f32[64,128], index: 5, kind: input, shape index: {}]
  %s6 = inlined_call_operand.vmem [shape: f32[1,128], index: 6, kind: input, shape index: {}]
  %s7 = inlined_call_operand.vmem [shape: f32[128,256], index: 7, kind: input, shape index: {}]
  %s8 = inlined_call_operand.vmem [shape: f32[1,256], index: 8, kind: input, shape index: {}]
  %s9 = inlined_call_operand.vmem [shape: f32[256,3], index: 9, kind: input, shape index: {}]
  %s10 = inlined_call_operand.vmem [shape: f32[1,3], index: 10, kind: input, shape index: {}]
  %s11 = inlined_call_operand.hbm [shape: f32[2,1,3], index: 11, kind: output, shape index: {}]
  %s12 = sld [smem:[#allocation0]]
  $region77: #{classifier_forward.1} parent=0
    _
  %s14 = ssub.s32 1, %s12
  %s15 = scalar_select 0, %s14, %s12
  $region1: #{classifier_forward.1} parent=0
    #allocation2 [shape = 'u8[1024]{0}', space=vmem, size = 0x400, scoped, tag = 'output window, operand 0']
    #allocation3 [shape = 's32[2]{0}', space=sflag, size = 0x8, scoped, tag = 'scoped memory for classifier_forward.1']
    %16 = vsyncpa [#allocation3], 0
    %s17 = scalar_lea.sflag [#allocation3], 1
    %18 = vsyncpa %s17, 0
    loop: start=0, step=1, limit=4
    $region2: #{classifier_forward.1} parent=1 // loop_pre_header
      _
    $region3: #{classifier_forward.1} parent=1 // loop_header
      %s20 = sphi 0, %s24
      %p21 = scmp.ge.s32.totalorder %s20, 4
      %s30 = sphi 0, %s32
      %s33 = sphi 0, %s30
      %s34 = sphi 0, %s33
      %s50 = sphi 0, %s34
      %s54 = sphi 0, %s54
      %s56 = sphi 0, %s54
      %s57 = sphi 0, %s56
      %s71 = sphi 0, %s57
      %s75 = sphi 0, %s75
      %s77 = sphi 0, %s75
      %s78 = sphi 0, %s77
      %s92 = sphi 0, %s78
      %s96 = sphi 0, %s96
      %s98 = sphi 0, %s96
      %s99 = sphi 0, %s98
      %s113 = sphi 0, %s99
      %s117 = sphi 0, %s117
      %s119 = sphi 0, %s117
      %s120 = sphi 0, %s119
      %s134 = sphi 0, %s120
      %s138 = sphi 0, %s138
      %s140 = sphi 0, %s138
      %s141 = sphi 0, %s140
      %s155 = sphi 0, %s141
      %s159 = sphi 0, %s159
      %s161 = sphi 0, %s159
      %s162 = sphi 0, %s161
      %s176 = sphi 0, %s162
      %s180 = sphi 0, %s180
      %s182 = sphi 0, %s180
      %s183 = sphi 0, %s182
      %s197 = sphi 0, %s183
      %s201 = sphi 0, %s201
      %s203 = sphi 0, %s201
      %s204 = sphi 0, %s203
      %s218 = sphi 0, %s204
      %s222 = sphi 0, %s222
      %s224 = sphi 0, %s222
      %s225 = sphi 0, %s224
      %s239 = sphi 0, %s225
      %s243 = sphi 0, %s243
      %s245 = sphi 0, %s243
      %s246 = sphi 0, %s245
      %s260 = sphi 0, %s246
      %s266 = sphi 0, %s268
      %s269 = sphi 0, %s266
      %s270 = sphi 0, %s269
      %s286 = sphi 0, %s270
    $region4: #{classifier_forward.1} parent=1 // loop_header_branch
      %23 = sbr.rel (%p21) target = $region8
    $region5: #{classifier_forward.1} parent=1 // loop_body
      %s25 = ssub.s32 %s20, 1
      %s26 = ssub.s32 %s20, 2
      %s27 = sadd.s32 %s20, 1
      %s28 = ssub.s32 %s20, %s27
      %p29 = scmp.eq.s32.totalorder %s28, 0
      %s31 = sadd.s32 %s30, 1
      %s32 = scalar_select %p29, %s30, %s31
      %p35 = pneg %p29
      %p36 = scmp.eq.s32.totalorder %s20, 1
      %p37 = por %p35, %p36
      %p38 = scmp.ne.s32.totalorder %s30, %s33
      %p39 = scmp.eq.s32.totalorder %s20, 0
      %p40 = por %p38, %p39
      %p41 = scmp.ne.s32.totalorder %s30, %s33
      %p42 = scmp.eq.s32.totalorder %s25, 1
      %p43 = por %p41, %p42
      %p44 = scmp.ne.s32.totalorder %s33, %s34
      %p45 = scmp.eq.s32.totalorder %s25, 0
      %p46 = por %p44, %p45
      %p47 = scmp.ne.s32.totalorder %s33, %s34
      %p48 = scmp.eq.s32.totalorder %s26, 1
      %p49 = por %p47, %p48
      %p51 = scmp.ne.s32.totalorder %s34, %s50
      %p52 = scmp.eq.s32.totalorder %s26, 0
      %p53 = por %p51, %p52
      %s55 = sadd.s32 %s54, 1
      %p58 = scmp.eq.s32.totalorder %s20, 1
      %p59 = scmp.ne.s32.totalorder %s54, %s56
      %p60 = scmp.eq.s32.totalorder %s20, 0
      %p61 = por %p59, %p60
      %p62 = scmp.ne.s32.totalorder %s54, %s56
      %p63 = scmp.eq.s32.totalorder %s25, 1
      %p64 = por %p62, %p63
      %p65 = scmp.ne.s32.totalorder %s56, %s57
      %p66 = scmp.eq.s32.totalorder %s25, 0
      %p67 = por %p65, %p66
      %p68 = scmp.ne.s32.totalorder %s56, %s57
      %p69 = scmp.eq.s32.totalorder %s26, 1
      %p70 = por %p68, %p69
      %p72 = scmp.ne.s32.totalorder %s57, %s71
      %p73 = scmp.eq.s32.totalorder %s26, 0
      %p74 = por %p72, %p73
      %s76 = sadd.s32 %s75, 1
      %p79 = scmp.eq.s32.totalorder %s20, 1
      %p80 = scmp.ne.s32.totalorder %s75, %s77
      %p81 = scmp.eq.s32.totalorder %s20, 0
      %p82 = por %p80, %p81
      %p83 = scmp.ne.s32.totalorder %s75, %s77
      %p84 = scmp.eq.s32.totalorder %s25, 1
      %p85 = por %p83, %p84
      %p86 = scmp.ne.s32.totalorder %s77, %s78
      %p87 = scmp.eq.s32.totalorder %s25, 0
      %p88 = por %p86, %p87
      %p89 = scmp.ne.s32.totalorder %s77, %s78
      %p90 = scmp.eq.s32.totalorder %s26, 1
      %p91 = por %p89, %p90
      %p93 = scmp.ne.s32.totalorder %s78, %s92
      %p94 = scmp.eq.s32.totalorder %s26, 0
      %p95 = por %p93, %p94
      %s97 = sadd.s32 %s96, 1
      %p100 = scmp.eq.s32.totalorder %s20, 1
      %p101 = scmp.ne.s32.totalorder %s96, %s98
      %p102 = scmp.eq.s32.totalorder %s20, 0
      %p103 = por %p101, %p102
      %p104 = scmp.ne.s32.totalorder %s96, %s98
      %p105 = scmp.eq.s32.totalorder %s25, 1
      %p106 = por %p104, %p105
      %p107 = scmp.ne.s32.totalorder %s98, %s99
      %p108 = scmp.eq.s32.totalorder %s25, 0
      %p109 = por %p107, %p108
      %p110 = scmp.ne.s32.totalorder %s98, %s99
      %p111 = scmp.eq.s32.totalorder %s26, 1
      %p112 = por %p110, %p111
      %p114 = scmp.ne.s32.totalorder %s99, %s113
      %p115 = scmp.eq.s32.totalorder %s26, 0
      %p116 = por %p114, %p115
      %s118 = sadd.s32 %s117, 1
      %p121 = scmp.eq.s32.totalorder %s20, 1
      %p122 = scmp.ne.s32.totalorder %s117, %s119
      %p123 = scmp.eq.s32.totalorder %s20, 0
      %p124 = por %p122, %p123
      %p125 = scmp.ne.s32.totalorder %s117, %s119
      %p126 = scmp.eq.s32.totalorder %s25, 1
      %p127 = por %p125, %p126
      %p128 = scmp.ne.s32.totalorder %s119, %s120
      %p129 = scmp.eq.s32.totalorder %s25, 0
      %p130 = por %p128, %p129
      %p131 = scmp.ne.s32.totalorder %s119, %s120
      %p132 = scmp.eq.s32.totalorder %s26, 1
      %p133 = por %p131, %p132
      %p135 = scmp.ne.s32.totalorder %s120, %s134
      %p136 = scmp.eq.s32.totalorder %s26, 0
      %p137 = por %p135, %p136
      %s139 = sadd.s32 %s138, 1
      %p142 = scmp.eq.s32.totalorder %s20, 1
      %p143 = scmp.ne.s32.totalorder %s138, %s140
      %p144 = scmp.eq.s32.totalorder %s20, 0
      %p145 = por %p143, %p144
      %p146 = scmp.ne.s32.totalorder %s138, %s140
      %p147 = scmp.eq.s32.totalorder %s25, 1
      %p148 = por %p146, %p147
      %p149 = scmp.ne.s32.totalorder %s140, %s141
      %p150 = scmp.eq.s32.totalorder %s25, 0
      %p151 = por %p149, %p150
      %p152 = scmp.ne.s32.totalorder %s140, %s141
      %p153 = scmp.eq.s32.totalorder %s26, 1
      %p154 = por %p152, %p153
      %p156 = scmp.ne.s32.totalorder %s141, %s155
      %p157 = scmp.eq.s32.totalorder %s26, 0
      %p158 = por %p156, %p157
      %s160 = sadd.s32 %s159, 1
      %p163 = scmp.eq.s32.totalorder %s20, 1
      %p164 = scmp.ne.s32.totalorder %s159, %s161
      %p165 = scmp.eq.s32.totalorder %s20, 0
      %p166 = por %p164, %p165
      %p167 = scmp.ne.s32.totalorder %s159, %s161
      %p168 = scmp.eq.s32.totalorder %s25, 1
      %p169 = por %p167, %p168
      %p170 = scmp.ne.s32.totalorder %s161, %s162
      %p171 = scmp.eq.s32.totalorder %s25, 0
      %p172 = por %p170, %p171
      %p173 = scmp.ne.s32.totalorder %s161, %s162
      %p174 = scmp.eq.s32.totalorder %s26, 1
      %p175 = por %p173, %p174
      %p177 = scmp.ne.s32.totalorder %s162, %s176
      %p178 = scmp.eq.s32.totalorder %s26, 0
      %p179 = por %p177, %p178
      %s181 = sadd.s32 %s180, 1
      %p184 = scmp.eq.s32.totalorder %s20, 1
      %p185 = scmp.ne.s32.totalorder %s180, %s182
      %p186 = scmp.eq.s32.totalorder %s20, 0
      %p187 = por %p185, %p186
      %p188 = scmp.ne.s32.totalorder %s180, %s182
      %p189 = scmp.eq.s32.totalorder %s25, 1
      %p190 = por %p188, %p189
      %p191 = scmp.ne.s32.totalorder %s182, %s183
      %p192 = scmp.eq.s32.totalorder %s25, 0
      %p193 = por %p191, %p192
      %p194 = scmp.ne.s32.totalorder %s182, %s183
      %p195 = scmp.eq.s32.totalorder %s26, 1
      %p196 = por %p194, %p195
      %p198 = scmp.ne.s32.totalorder %s183, %s197
      %p199 = scmp.eq.s32.totalorder %s26, 0
      %p200 = por %p198, %p199
      %s202 = sadd.s32 %s201, 1
      %p205 = scmp.eq.s32.totalorder %s20, 1
      %p206 = scmp.ne.s32.totalorder %s201, %s203
      %p207 = scmp.eq.s32.totalorder %s20, 0
      %p208 = por %p206, %p207
      %p209 = scmp.ne.s32.totalorder %s201, %s203
      %p210 = scmp.eq.s32.totalorder %s25, 1
      %p211 = por %p209, %p210
      %p212 = scmp.ne.s32.totalorder %s203, %s204
      %p213 = scmp.eq.s32.totalorder %s25, 0
      %p214 = por %p212, %p213
      %p215 = scmp.ne.s32.totalorder %s203, %s204
      %p216 = scmp.eq.s32.totalorder %s26, 1
      %p217 = por %p215, %p216
      %p219 = scmp.ne.s32.totalorder %s204, %s218
      %p220 = scmp.eq.s32.totalorder %s26, 0
      %p221 = por %p219, %p220
      %s223 = sadd.s32 %s222, 1
      %p226 = scmp.eq.s32.totalorder %s20, 1
      %p227 = scmp.ne.s32.totalorder %s222, %s224
      %p228 = scmp.eq.s32.totalorder %s20, 0
      %p229 = por %p227, %p228
      %p230 = scmp.ne.s32.totalorder %s222, %s224
      %p231 = scmp.eq.s32.totalorder %s25, 1
      %p232 = por %p230, %p231
      %p233 = scmp.ne.s32.totalorder %s224, %s225
      %p234 = scmp.eq.s32.totalorder %s25, 0
      %p235 = por %p233, %p234
      %p236 = scmp.ne.s32.totalorder %s224, %s225
      %p237 = scmp.eq.s32.totalorder %s26, 1
      %p238 = por %p236, %p237
      %p240 = scmp.ne.s32.totalorder %s225, %s239
      %p241 = scmp.eq.s32.totalorder %s26, 0
      %p242 = por %p240, %p241
      %s244 = sadd.s32 %s243, 1
      %p247 = scmp.eq.s32.totalorder %s20, 1
      %p248 = scmp.ne.s32.totalorder %s243, %s245
      %p249 = scmp.eq.s32.totalorder %s20, 0
      %p250 = por %p248, %p249
      %p251 = scmp.ne.s32.totalorder %s243, %s245
      %p252 = scmp.eq.s32.totalorder %s25, 1
      %p253 = por %p251, %p252
      %p254 = scmp.ne.s32.totalorder %s245, %s246
      %p255 = scmp.eq.s32.totalorder %s25, 0
      %p256 = por %p254, %p255
      %p257 = scmp.ne.s32.totalorder %s245, %s246
      %p258 = scmp.eq.s32.totalorder %s26, 1
      %p259 = por %p257, %p258
      %p261 = scmp.ne.s32.totalorder %s246, %s260
      %p262 = scmp.eq.s32.totalorder %s26, 0
      %p263 = por %p261, %p262
      %s264 = ssub.s32 %s20, %s27
      %p265 = scmp.eq.s32.totalorder %s264, 0
      %s267 = sadd.s32 %s266, 1
      %s268 = scalar_select %p265, %s266, %s267
      %p271 = pneg %p265
      %p272 = scmp.eq.s32.totalorder %s20, 1
      %p273 = por %p271, %p272
      %p274 = scmp.ne.s32.totalorder %s266, %s269
      %p275 = scmp.eq.s32.totalorder %s20, 0
      %p276 = por %p274, %p275
      %p277 = scmp.ne.s32.totalorder %s266, %s269
      %p278 = scmp.eq.s32.totalorder %s25, 1
      %p279 = por %p277, %p278
      %p280 = scmp.ne.s32.totalorder %s269, %s270
      %p281 = scmp.eq.s32.totalorder %s25, 0
      %p282 = por %p280, %p281
      %p283 = scmp.ne.s32.totalorder %s269, %s270
      %p284 = scmp.eq.s32.totalorder %s26, 1
      %p285 = por %p283, %p284
      %p287 = scmp.ne.s32.totalorder %s270, %s286
      %p288 = scmp.eq.s32.totalorder %s26, 0
      %p289 = por %p287, %p288
      %p290 = scmp.le.s32.totalorder 1, %s20
      %p291 = scmp.lt.s32.totalorder %s20, 3
      %p292 = pnand %p290, %p291
      %p293 = pneg %p292
      // Predicated region
      $region9: #{classifier_forward.1} parent=5 // pred_check
        _
      $region10: #{classifier_forward.1} parent=5 // pred_check_branch
        %295 = sbr.rel (%p292) target = $region12
      $region11: #{classifier_forward.1} parent=5 // pred_region
        %s296 = ssub.s32 %s20, 1
        // Predicated region
        $region13: #{classifier_forward.1} parent=11 // pred_check
          %p297 = pneg %p67
        $region14: #{classifier_forward.1} parent=11 // pred_check_branch
          %299 = sbr.rel (%p297) target = $region16
        $region15: #{classifier_forward.1} parent=11 // pred_region
          _
        $region16: #{classifier_forward.1} parent=11 // pred_fallthru
          _
        // Predicated region
        $region17: #{classifier_forward.1} parent=11 // pred_check
          %p300 = pneg %p88
        $region18: #{classifier_forward.1} parent=11 // pred_check_branch
          %302 = sbr.rel (%p300) target = $region20
        $region19: #{classifier_forward.1} parent=11 // pred_region
          _
        $region20: #{classifier_forward.1} parent=11 // pred_fallthru
          _
        // Predicated region
        $region21: #{classifier_forward.1} parent=11 // pred_check
          %p303 = pneg %p109
        $region22: #{classifier_forward.1} parent=11 // pred_check_branch
          %305 = sbr.rel (%p303) target = $region24
        $region23: #{classifier_forward.1} parent=11 // pred_region
          _
        $region24: #{classifier_forward.1} parent=11 // pred_fallthru
          _
        // Predicated region
        $region25: #{classifier_forward.1} parent=11 // pred_check
          %p306 = pneg %p130
        $region26: #{classifier_forward.1} parent=11 // pred_check_branch
          %308 = sbr.rel (%p306) target = $region28
        $region27: #{classifier_forward.1} parent=11 // pred_region
          _
        $region28: #{classifier_forward.1} parent=11 // pred_fallthru
          _
        // Predicated region
        $region29: #{classifier_forward.1} parent=11 // pred_check
          %p309 = pneg %p151
        $region30: #{classifier_forward.1} parent=11 // pred_check_branch
          %311 = sbr.rel (%p309) target = $region32
        $region31: #{classifier_forward.1} parent=11 // pred_region
          _
        $region32: #{classifier_forward.1} parent=11 // pred_fallthru
          _
        // Predicated region
        $region33: #{classifier_forward.1} parent=11 // pred_check
          %p312 = pneg %p172
        $region34: #{classifier_forward.1} parent=11 // pred_check_branch
          %314 = sbr.rel (%p312) target = $region36
        $region35: #{classifier_forward.1} parent=11 // pred_region
          _
        $region36: #{classifier_forward.1} parent=11 // pred_fallthru
          _
        // Predicated region
        $region37: #{classifier_forward.1} parent=11 // pred_check
          %p315 = pneg %p193
        $region38: #{classifier_forward.1} parent=11 // pred_check_branch
          %317 = sbr.rel (%p315) target = $region40
        $region39: #{classifier_forward.1} parent=11 // pred_region
          _
        $region40: #{classifier_forward.1} parent=11 // pred_fallthru
          _
        // Predicated region
        $region41: #{classifier_forward.1} parent=11 // pred_check
          %p318 = pneg %p214
        $region42: #{classifier_forward.1} parent=11 // pred_check_branch
          %320 = sbr.rel (%p318) target = $region44
        $region43: #{classifier_forward.1} parent=11 // pred_region
          _
        $region44: #{classifier_forward.1} parent=11 // pred_fallthru
          _
        // Predicated region
        $region45: #{classifier_forward.1} parent=11 // pred_check
          %p321 = pneg %p235
        $region46: #{classifier_forward.1} parent=11 // pred_check_branch
          %323 = sbr.rel (%p321) target = $region48
        $region47: #{classifier_forward.1} parent=11 // pred_region
          _
        $region48: #{classifier_forward.1} parent=11 // pred_fallthru
          _
        // Predicated region
        $region49: #{classifier_forward.1} parent=11 // pred_check
          %p324 = pneg %p256
        $region50: #{classifier_forward.1} parent=11 // pred_check_branch
          %326 = sbr.rel (%p324) target = $region52
        $region51: #{classifier_forward.1} parent=11 // pred_region
          _
        $region52: #{classifier_forward.1} parent=11 // pred_fallthru
          _
      $region12: #{classifier_forward.1} parent=5 // pred_fallthru
        _
      %p327 = scmp.lt.s32.totalorder %s20, 2
      // Predicated region
      $region53: #{classifier_forward.1} parent=5 // pred_check
        %p328 = pneg %p327
      $region54: #{classifier_forward.1} parent=5 // pred_check_branch
        %330 = sbr.rel (%p328) target = $region56
      $region55: #{classifier_forward.1} parent=5 // pred_region
        // Predicated region
        $region57: #{classifier_forward.1} parent=55 // pred_check
          %p331 = pneg %p40
        $region58: #{classifier_forward.1} parent=55 // pred_check_branch
          %333 = sbr.rel (%p331) target = $region60
        $region59: #{classifier_forward.1} parent=55 // pred_region
          %p334 = scmp.lt.s32.totalorder %s20, 1
          %s335 = scalar_select %p334, %s20, 1
          %s336 = smul.addr %s335, 64
          %s337 = smul.addr %s336, 8
          %s338 = scalar_lea.vmem %s0, %s337
        $region60: #{classifier_forward.1} parent=55 // pred_fallthru
          _
      $region56: #{classifier_forward.1} parent=5 // pred_fallthru
        _
      %p339 = scmp.le.s32.totalorder 1, %s20
      %p340 = scmp.lt.s32.totalorder %s20, 3
      %p341 = pnand %p339, %p340
      %p342 = pneg %p341
      // Predicated region
      $region61: #{classifier_forward.1} parent=5 // pred_check
        _
      $region62: #{classifier_forward.1} parent=5 // pred_check_branch
        %344 = sbr.rel (%p341) target = $region64
      $region63: #{classifier_forward.1} parent=5 // pred_region
        %s345 = ssub.s32 %s20, 1
        %p346 = scmp.lt.s32.totalorder %s25, 1
        %s347 = scalar_select %p346, %s25, 1
        %s348 = smul.addr %s347, 64
        %s349 = smul.addr %s348, 8
        %s350 = scalar_lea.vmem %s0, %s349
        %p351 = pneg %p46
        %p352 = pneg %p43
        %p353 = pneg %p67
        %p354 = pneg %p64
        %p355 = pneg %p88
        %p356 = pneg %p85
        %p357 = pneg %p109
        %p358 = pneg %p106
        %p359 = pneg %p130
        %p360 = pneg %p127
        %p361 = pneg %p151
        %p362 = pneg %p148
        %p363 = pneg %p172
        %p364 = pneg %p169
        %p365 = pneg %p193
        %p366 = pneg %p190
        %p367 = pneg %p214
        %p368 = pneg %p211
        %p369 = pneg %p235
        %p370 = pneg %p232
        %p371 = pneg %p256
        %p372 = pneg %p253
        %p373 = pneg %p282
        %p374 = pneg %p279
        %s375 = sand.u32 %s269, 1
        %s376 = scalar_lea.sflag [#allocation3], %s375
        %s377 = sand.u32 %s269, 1
        %s378 = scalar_lea.vmem [#allocation2], %s377
        %p379 = scmp.lt.s32.totalorder %s25, 1
        %s380 = scalar_select %p379, %s25, 1
        %s381 = smul.addr %s380, 64
        %s382 = smul.addr %s381, 8
        %s383 = scalar_lea.vmem %s0, %s382
        %v384 = vld [vmem:[%s383] sm:$0xff]
        %v385 = vld [vmem:[%s383 + $0x8] sm:$0xff]
        %v386 = vld [vmem:[%s383 + $0x10] sm:$0xff]
        %v387 = vld [vmem:[%s383 + $0x18] sm:$0xff]
        %v388 = vld [vmem:[%s383 + $0x20] sm:$0xff]
        %v389 = vld [vmem:[%s383 + $0x28] sm:$0xff]
        %v390 = vld [vmem:[%s383 + $0x30] sm:$0xff]
        %v391 = vld [vmem:[%s383 + $0x38] sm:$0xff]
        %v392 = vld [vmem:[%s383 + $0x40] sm:$0xff]
        %v393 = vld [vmem:[%s383 + $0x48] sm:$0xff]
        %v394 = vld [vmem:[%s383 + $0x50] sm:$0xff]
        %v395 = vld [vmem:[%s383 + $0x58] sm:$0xff]
        %v396 = vld [vmem:[%s383 + $0x60] sm:$0xff]
        %v397 = vld [vmem:[%s383 + $0x68] sm:$0xff]
        %v398 = vld [vmem:[%s383 + $0x70] sm:$0xff]
        %v399 = vld [vmem:[%s383 + $0x78] sm:$0xff]
        %v400 = vld [vmem:[%s383 + $0x80] sm:$0xff]
        %v401 = vld [vmem:[%s383 + $0x88] sm:$0xff]
        %v402 = vld [vmem:[%s383 + $0x90] sm:$0xff]
        %v403 = vld [vmem:[%s383 + $0x98] sm:$0xff]
        %v404 = vld [vmem:[%s383 + $0xa0] sm:$0xff]
        %v405 = vld [vmem:[%s383 + $0xa8] sm:$0xff]
        %v406 = vld [vmem:[%s383 + $0xb0] sm:$0xff]
        %v407 = vld [vmem:[%s383 + $0xb8] sm:$0xff]
        %v408 = vld [vmem:[%s383 + $0xc0] sm:$0xff]
        %v409 = vld [vmem:[%s383 + $0xc8] sm:$0xff]
        %v410 = vld [vmem:[%s383 + $0xd0] sm:$0xff]
        %v411 = vld [vmem:[%s383 + $0xd8] sm:$0xff]
        %v412 = vld [vmem:[%s383 + $0xe0] sm:$0xff]
        %v413 = vld [vmem:[%s383 + $0xe8] sm:$0xff]
        %v414 = vld [vmem:[%s383 + $0xf0] sm:$0xff]
        %v415 = vld [vmem:[%s383 + $0xf8] sm:$0xff]
        %v416 = vld [vmem:[%s383 + $0x100] sm:$0xff]
        %v417 = vld [vmem:[%s383 + $0x108] sm:$0xff]
        %v418 = vld [vmem:[%s383 + $0x110] sm:$0xff]
        %v419 = vld [vmem:[%s383 + $0x118] sm:$0xff]
        %v420 = vld [vmem:[%s383 + $0x120] sm:$0xff]
        %v421 = vld [vmem:[%s383 + $0x128] sm:$0xff]
        %v422 = vld [vmem:[%s383 + $0x130] sm:$0xff]
        %v423 = vld [vmem:[%s383 + $0x138] sm:$0xff]
        %v424 = vld [vmem:[%s383 + $0x140] sm:$0xff]
        %v425 = vld [vmem:[%s383 + $0x148] sm:$0xff]
        %v426 = vld [vmem:[%s383 + $0x150] sm:$0xff]
        %v427 = vld [vmem:[%s383 + $0x158] sm:$0xff]
        %v428 = vld [vmem:[%s383 + $0x160] sm:$0xff]
        %v429 = vld [vmem:[%s383 + $0x168] sm:$0xff]
        %v430 = vld [vmem:[%s383 + $0x170] sm:$0xff]
        %v431 = vld [vmem:[%s383 + $0x178] sm:$0xff]
        %v432 = vld [vmem:[%s383 + $0x180] sm:$0xff]
        %v433 = vld [vmem:[%s383 + $0x188] sm:$0xff]
        %v434 = vld [vmem:[%s383 + $0x190] sm:$0xff]
        %v435 = vld [vmem:[%s383 + $0x198] sm:$0xff]
        %v436 = vld [vmem:[%s383 + $0x1a0] sm:$0xff]
        %v437 = vld [vmem:[%s383 + $0x1a8] sm:$0xff]
        %v438 = vld [vmem:[%s383 + $0x1b0] sm:$0xff]
        %v439 = vld [vmem:[%s383 + $0x1b8] sm:$0xff]
        %v440 = vld [vmem:[%s383 + $0x1c0] sm:$0xff]
        %v441 = vld [vmem:[%s383 + $0x1c8] sm:$0xff]
        %v442 = vld [vmem:[%s383 + $0x1d0] sm:$0xff]
        %v443 = vld [vmem:[%s383 + $0x1d8] sm:$0xff]
        %v444 = vld [vmem:[%s383 + $0x1e0] sm:$0xff]
        %v445 = vld [vmem:[%s383 + $0x1e8] sm:$0xff]
        %v446 = vld [vmem:[%s383 + $0x1f0] sm:$0xff]
        %v447 = vld [vmem:[%s383 + $0x1f8] sm:$0xff]
        %v448 = vld [vmem:[%s1] sm:$0xff]
        %v449 = vld [vmem:[%s1 + $0x8] sm:$0xff]
        %v450 = vld [vmem:[%s1 + $0x10] sm:$0xff]
        %v451 = vld [vmem:[%s1 + $0x18] sm:$0xff]
        %v452 = vld [vmem:[%s1 + $0x20] sm:$0xff]
        %v453 = vld [vmem:[%s1 + $0x28] sm:$0xff]
        %v454 = vld [vmem:[%s1 + $0x30] sm:$0xff]
        %v455 = vld [vmem:[%s1 + $0x38] sm:$0xff]
        %v456 = vld [vmem:[%s2] sm:$0x1]
        %v458 = vlaneseq
        %v459 = vshrl.u32 %v458, 7
        %v460 = vsub.s32 0, %v459
        %v461 = vrot.slane %v456, %v460
        %vm463 = vcmask 523264
        %v465 = vsel %vm463, %v384, 0
        %v468 = vsel %vm463, %v385, 0
        %v471 = vsel %vm463, %v386, 0
        %v474 = vsel %vm463, %v387, 0
        %v477 = vsel %vm463, %v388, 0
        %v480 = vsel %vm463, %v389, 0
        %v483 = vsel %vm463, %v390, 0
        %v486 = vsel %vm463, %v391, 0
        %v489 = vsel %vm463, %v392, 0
        %v492 = vsel %vm463, %v393, 0
        %v495 = vsel %vm463, %v394, 0
        %v498 = vsel %vm463, %v395, 0
        %v501 = vsel %vm463, %v396, 0
        %v504 = vsel %vm463, %v397, 0
        %v507 = vsel %vm463, %v398, 0
        %v510 = vsel %vm463, %v399, 0
        %v513 = vsel %vm463, %v400, 0
        %v516 = vsel %vm463, %v401, 0
        %v519 = vsel %vm463, %v402, 0
        %v522 = vsel %vm463, %v403, 0
        %v525 = vsel %vm463, %v404, 0
        %v528 = vsel %vm463, %v405, 0
        %v531 = vsel %vm463, %v406, 0
        %v534 = vsel %vm463, %v407, 0
        %v537 = vsel %vm463, %v408, 0
        %v540 = vsel %vm463, %v409, 0
        %v543 = vsel %vm463, %v410, 0
        %v546 = vsel %vm463, %v411, 0
        %v549 = vsel %vm463, %v412, 0
        %v552 = vsel %vm463, %v413, 0
        %v555 = vsel %vm463, %v414, 0
        %v558 = vsel %vm463, %v415, 0
        %v561 = vsel %vm463, %v416, 0
        %v564 = vsel %vm463, %v417, 0
        %v567 = vsel %vm463, %v418, 0
        %v570 = vsel %vm463, %v419, 0
        %v573 = vsel %vm463, %v420, 0
        %v576 = vsel %vm463, %v421, 0
        %v579 = vsel %vm463, %v422, 0
        %v582 = vsel %vm463, %v423, 0
        %v585 = vsel %vm463, %v424, 0
        %v588 = vsel %vm463, %v425, 0
        %v591 = vsel %vm463, %v426, 0
        %v594 = vsel %vm463, %v427, 0
        %v597 = vsel %vm463, %v428, 0
        %v600 = vsel %vm463, %v429, 0
        %v603 = vsel %vm463, %v430, 0
        %v606 = vsel %vm463, %v431, 0
        %v609 = vsel %vm463, %v432, 0
        %v612 = vsel %vm463, %v433, 0
        %v615 = vsel %vm463, %v434, 0
        %v618 = vsel %vm463, %v435, 0
        %v621 = vsel %vm463, %v436, 0
        %v624 = vsel %vm463, %v437, 0
        %v627 = vsel %vm463, %v438, 0
        %v630 = vsel %vm463, %v439, 0
        %v633 = vsel %vm463, %v440, 0
        %v636 = vsel %vm463, %v441, 0
        %v639 = vsel %vm463, %v442, 0
        %v642 = vsel %vm463, %v443, 0
        %v645 = vsel %vm463, %v444, 0
        %v648 = vsel %vm463, %v445, 0
        %v651 = vsel %vm463, %v446, 0
        %v654 = vsel %vm463, %v447, 0
        %656 = vmatprep.subr.mxu0 0.0
        %657 = vmatpush1.msra.mxu0 %v448
        %658 = vmatprep.subr.mxu0 0.0
        %659 = vmatpush1.msra.mxu0 %v449
        %660 = vmatprep.subr.mxu0 0.0
        %661 = vmatpush1.msra.mxu0 %v450
        %662 = vmatprep.subr.mxu0 0.0
        %663 = vmatpush1.msra.mxu0 %v451
        %664 = vmatprep.subr.mxu0 0.0
        %665 = vmatpush1.msra.mxu0 %v452
        %666 = vmatprep.subr.mxu0 0.0
        %667 = vmatpush1.msra.mxu0 %v453
        %668 = vmatprep.subr.mxu0 0.0
        %669 = vmatpush1.msra.mxu0 %v454
        %670 = vmatprep.subr.mxu0 0.0
        %671 = vmatpush1.msra.mxu0 %v455
        %672 = vmatprep.subr.mxu0 0.0
        %673 = vmatpush1.msra.mxu0 0.0
        %674 = vmatprep.subr.mxu0 0.0
        %675 = vmatpush1.msra.mxu0 0.0
        %676 = vmatprep.subr.mxu0 0.0
        %677 = vmatpush1.msra.mxu0 0.0
        %678 = vmatprep.subr.mxu0 0.0
        %679 = vmatpush1.msra.mxu0 0.0
        %680 = vmatprep.subr.mxu0 0.0
        %681 = vmatpush1.msra.mxu0 0.0
        %682 = vmatprep.subr.mxu0 0.0
        %683 = vmatpush1.msra.mxu0 0.0
        %684 = vmatprep.subr.mxu0 0.0
        %685 = vmatpush1.msra.mxu0 0.0
        %686 = vmatprep.subr.mxu0 0.0
        %687 = vmatpush1.msra.mxu0 0.0
        %688 = vmatprep.subr.mxu0 0.0
        %689 = vmatpush1.msra.mxu0 0.0
        %690 = vmatprep.subr.mxu0 0.0
        %691 = vmatpush1.msra.mxu0 0.0
        %692 = vmatprep.subr.mxu0 0.0
        %693 = vmatpush1.msra.mxu0 0.0
        %694 = vmatprep.subr.mxu0 0.0
        %695 = vmatpush1.msra.mxu0 0.0
        %696 = vmatprep.subr.mxu0 0.0
        %697 = vmatpush1.msra.mxu0 0.0
        %698 = vmatprep.subr.mxu0 0.0
        %699 = vmatpush1.msra.mxu0 0.0
        %700 = vmatprep.subr.mxu0 0.0
        %701 = vmatpush1.msra.mxu0 0.0
        %702 = vmatprep.subr.mxu0 0.0
        %703 = vmatpush1.msra.mxu0 0.0
        %704 = vmatprep.subr.mxu0 0.0
        %705 = vmatpush1.msra.mxu0 0.0
        %706 = vmatprep.subr.mxu0 0.0
        %707 = vmatpush1.msra.mxu0 0.0
        %708 = vmatprep.subr.mxu0 0.0
        %709 = vmatpush1.msra.mxu0 0.0
        %710 = vmatprep.subr.mxu0 0.0
        %711 = vmatpush1.msra.mxu0 0.0
        %712 = vmatprep.subr.mxu0 0.0
        %713 = vmatpush1.msra.mxu0 0.0
        %714 = vmatprep.subr.mxu0 0.0
        %715 = vmatpush1.msra.mxu0 0.0
        %716 = vmatprep.subr.mxu0 0.0
        %717 = vmatpush1.msra.mxu0 0.0
        %718 = vmatprep.subr.mxu0 0.0
        %719 = vmatpush1.msra.mxu0 0.0
        %720 = vmatprep.mubr.f32.mxu0 0.0
        %721 = vmatmul.mubr.f32.gmra.mrb[0].mxu0 %v465
        %v722 = vpop.f32.mrb[0].mxu0
        %v723 = vadd.f32 %v461, %v722
        %v724 = vpop.f32.mrb[0].mxu0
        %725 = vmatprep.mubr.f32.mxu0 0.0
        %726 = vmatmul.mubr.f32.gmra.mrb[0].mxu0 %v468
        %v727 = vpop.f32.mrb[0].mxu0
        %v728 = vadd.f32 %v461, %v727
        %v729 = vpop.f32.mrb[0].mxu0
        %730 = vmatprep.mubr.f32.mxu0 0.0
        %731 = vmatmul.mubr.f32.gmra.mrb[0].mxu0 %v471
        %v732 = vpop.f32.mrb[0].mxu0
        %v733 = vadd.f32 %v461, %v732
        %v734 = vpop.f32.mrb[0].mxu0
        %735 = vmatprep.mubr.f32.mxu0 0.0
        %736 = vmatmul.mubr.f32.gmra.mrb[0].mxu0 %v474
        %v737 = vpop.f32.mrb[0].mxu0
        %v738 = vadd.f32 %v461, %v737
        %v739 = vpop.f32.mrb[0].mxu0
        %740 = vmatprep.mubr.f32.mxu0 0.0
        %741 = vmatmul.mubr.f32.gmra.mrb[0].mxu0 %v477
        %v742 = vpop.f32.mrb[0].mxu0
        %v743 = vadd.f32 %v461, %v742
        %v744 = vpop.f32.mrb[0].mxu0
        %745 = vmatprep.mubr.f32.mxu0 0.0
        %746 = vmatmul.mubr.f32.gmra.mrb[0].mxu0 %v480
        %v747 = vpop.f32.mrb[0].mxu0
        %v748 = vadd.f32 %v461, %v747
        %v749 = vpop.f32.mrb[0].mxu0
        %750 = vmatprep.mubr.f32.mxu0 0.0
        %751 = vmatmul.mubr.f32.gmra.mrb[0].mxu0 %v483
        %v752 = vpop.f32.mrb[0].mxu0
        %v753 = vadd.f32 %v461, %v752
        %v754 = vpop.f32.mrb[0].mxu0
        %755 = vmatprep.mubr.f32.mxu0 0.0
        %756 = vmatmul.mubr.f32.gmra.mrb[0].mxu0 %v486
        %v757 = vpop.f32.mrb[0].mxu0
        %v758 = vadd.f32 %v461, %v757
        %v759 = vpop.f32.mrb[0].mxu0
        %760 = vmatprep.mubr.f32.mxu0 0.0
        %761 = vmatmul.mubr.f32.gmra.mrb[0].mxu0 %v489
        %v762 = vpop.f32.mrb[0].mxu0
        %v763 = vadd.f32 %v461, %v762
        %v764 = vpop.f32.mrb[0].mxu0
        %765 = vmatprep.mubr.f32.mxu0 0.0
        %766 = vmatmul.mubr.f32.gmra.mrb[0].mxu0 %v492
        %v767 = vpop.f32.mrb[0].mxu0
        %v768 = vadd.f32 %v461, %v767
        %v769 = vpop.f32.mrb[0].mxu0
        %770 = vmatprep.mubr.f32.mxu0 0.0
        %771 = vmatmul.mubr.f32.gmra.mrb[0].mxu0 %v495
        %v772 = vpop.f32.mrb[0].mxu0
        %v773 = vadd.f32 %v461, %v772
        %v774 = vpop.f32.mrb[0].mxu0
        %775 = vmatprep.mubr.f32.mxu0 0.0
        %776 = vmatmul.mubr.f32.gmra.mrb[0].mxu0 %v498
        %v777 = vpop.f32.mrb[0].mxu0
        %v778 = vadd.f32 %v461, %v777
        %v779 = vpop.f32.mrb[0].mxu0
        %780 = vmatprep.mubr.f32.mxu0 0.0
        %781 = vmatmul.mubr.f32.gmra.mrb[0].mxu0 %v501
        %v782 = vpop.f32.mrb[0].mxu0
        %v783 = vadd.f32 %v461, %v782
        %v784 = vpop.f32.mrb[0].mxu0
        %785 = vmatprep.mubr.f32.mxu0 0.0
        %786 = vmatmul.mubr.f32.gmra.mrb[0].mxu0 %v504
        %v787 = vpop.f32.mrb[0].mxu0
        %v788 = vadd.f32 %v461, %v787
        %v789 = vpop.f32.mrb[0].mxu0
        %790 = vmatprep.mubr.f32.mxu0 0.0
        %791 = vmatmul.mubr.f32.gmra.mrb[0].mxu0 %v507
        %v792 = vpop.f32.mrb[0].mxu0
        %v793 = vadd.f32 %v461, %v792
        %v794 = vpop.f32.mrb[0].mxu0
        %795 = vmatprep.mubr.f32.mxu0 0.0
        %796 = vmatmul.mubr.f32.gmra.mrb[0].mxu0 %v510
        %v797 = vpop.f32.mrb[0].mxu0
        %v798 = vadd.f32 %v461, %v797
        %v799 = vpop.f32.mrb[0].mxu0
        %800 = vmatprep.mubr.f32.mxu0 0.0
        %801 = vmatmul.mubr.f32.gmra.mrb[0].mxu0 %v513
        %v802 = vpop.f32.mrb[0].mxu0
        %v803 = vadd.f32 %v461, %v802
        %v804 = vpop.f32.mrb[0].mxu0
        %805 = vmatprep.mubr.f32.mxu0 0.0
        %806 = vmatmul.mubr.f32.gmra.mrb[0].mxu0 %v516
        %v807 = vpop.f32.mrb[0].mxu0
        %v808 = vadd.f32 %v461, %v807
        %v809 = vpop.f32.mrb[0].mxu0
        %810 = vmatprep.mubr.f32.mxu0 0.0
        %811 = vmatmul.mubr.f32.gmra.mrb[0].mxu0 %v519
        %v812 = vpop.f32.mrb[0].mxu0
        %v813 = vadd.f32 %v461, %v812
        %v814 = vpop.f32.mrb[0].mxu0
        %815 = vmatprep.mubr.f32.mxu0 0.0
        %816 = vmatmul.mubr.f32.gmra.mrb[0].mxu0 %v522
        %v817 = vpop.f32.mrb[0].mxu0
        %v818 = vadd.f32 %v461, %v817
        %v819 = vpop.f32.mrb[0].mxu0
        %820 = vmatprep.mubr.f32.mxu0 0.0
        %821 = vmatmul.mubr.f32.gmra.mrb[0].mxu0 %v525
        %v822 = vpop.f32.mrb[0].mxu0
        %v823 = vadd.f32 %v461, %v822
        %v824 = vpop.f32.mrb[0].mxu0
        %825 = vmatprep.mubr.f32.mxu0 0.0
        %826 = vmatmul.mubr.f32.gmra.mrb[0].mxu0 %v528
        %v827 = vpop.f32.mrb[0].mxu0
        %v828 = vadd.f32 %v461, %v827
        %v829 = vpop.f32.mrb[0].mxu0
        %830 = vmatprep.mubr.f32.mxu0 0.0
        %831 = vmatmul.mubr.f32.gmra.mrb[0].mxu0 %v531
        %v832 = vpop.f32.mrb[0].mxu0
        %v833 = vadd.f32 %v461, %v832
        %v834 = vpop.f32.mrb[0].mxu0
        %835 = vmatprep.mubr.f32.mxu0 0.0
        %836 = vmatmul.mubr.f32.gmra.mrb[0].mxu0 %v534
        %v837 = vpop.f32.mrb[0].mxu0
        %v838 = vadd.f32 %v461, %v837
        %v839 = vpop.f32.mrb[0].mxu0
        %840 = vmatprep.mubr.f32.mxu0 0.0
        %841 = vmatmul.mubr.f32.gmra.mrb[0].mxu0 %v537
        %v842 = vpop.f32.mrb[0].mxu0
        %v843 = vadd.f32 %v461, %v842
        %v844 = vpop.f32.mrb[0].mxu0
        %845 = vmatprep.mubr.f32.mxu0 0.0
        %846 = vmatmul.mubr.f32.gmra.mrb[0].mxu0 %v540
        %v847 = vpop.f32.mrb[0].mxu0
        %v848 = vadd.f32 %v461, %v847
        %v849 = vpop.f32.mrb[0].mxu0
        %850 = vmatprep.mubr.f32.mxu0 0.0
        %851 = vmatmul.mubr.f32.gmra.mrb[0].mxu0 %v543
        %v852 = vpop.f32.mrb[0].mxu0
        %v853 = vadd.f32 %v461, %v852
        %v854 = vpop.f32.mrb[0].mxu0
        %855 = vmatprep.mubr.f32.mxu0 0.0
        %856 = vmatmul.mubr.f32.gmra.mrb[0].mxu0 %v546
        %v857 = vpop.f32.mrb[0].mxu0
        %v858 = vadd.f32 %v461, %v857
        %v859 = vpop.f32.mrb[0].mxu0
        %860 = vmatprep.mubr.f32.mxu0 0.0
        %861 = vmatmul.mubr.f32.gmra.mrb[0].mxu0 %v549
        %v862 = vpop.f32.mrb[0].mxu0
        %v863 = vadd.f32 %v461, %v862
        %v864 = vpop.f32.mrb[0].mxu0
        %865 = vmatprep.mubr.f32.mxu0 0.0
        %866 = vmatmul.mubr.f32.gmra.mrb[0].mxu0 %v552
        %v867 = vpop.f32.mrb[0].mxu0
        %v868 = vadd.f32 %v461, %v867
        %v869 = vpop.f32.mrb[0].mxu0
        %870 = vmatprep.mubr.f32.mxu0 0.0
        %871 = vmatmul.mubr.f32.gmra.mrb[0].mxu0 %v555
        %v872 = vpop.f32.mrb[0].mxu0
        %v873 = vadd.f32 %v461, %v872
        %v874 = vpop.f32.mrb[0].mxu0
        %875 = vmatprep.mubr.f32.mxu0 0.0
        %876 = vmatmul.mubr.f32.gmra.mrb[0].mxu0 %v558
        %v877 = vpop.f32.mrb[0].mxu0
        %v878 = vadd.f32 %v461, %v877
        %v879 = vpop.f32.mrb[0].mxu0
        %880 = vmatprep.mubr.f32.mxu0 0.0
        %881 = vmatmul.mubr.f32.gmra.mrb[0].mxu0 %v561
        %v882 = vpop.f32.mrb[0].mxu0
        %v883 = vadd.f32 %v461, %v882
        %v884 = vpop.f32.mrb[0].mxu0
        %885 = vmatprep.mubr.f32.mxu0 0.0
        %886 = vmatmul.mubr.f32.gmra.mrb[0].mxu0 %v564
        %v887 = vpop.f32.mrb[0].mxu0
        %v888 = vadd.f32 %v461, %v887
        %v889 = vpop.f32.mrb[0].mxu0
        %890 = vmatprep.mubr.f32.mxu0 0.0
        %891 = vmatmul.mubr.f32.gmra.mrb[0].mxu0 %v567
        %v892 = vpop.f32.mrb[0].mxu0
        %v893 = vadd.f32 %v461, %v892
        %v894 = vpop.f32.mrb[0].mxu0
        %895 = vmatprep.mubr.f32.mxu0 0.0
        %896 = vmatmul.mubr.f32.gmra.mrb[0].mxu0 %v570
        %v897 = vpop.f32.mrb[0].mxu0
        %v898 = vadd.f32 %v461, %v897
        %v899 = vpop.f32.mrb[0].mxu0
        %900 = vmatprep.mubr.f32.mxu0 0.0
        %901 = vmatmul.mubr.f32.gmra.mrb[0].mxu0 %v573
        %v902 = vpop.f32.mrb[0].mxu0
        %v903 = vadd.f32 %v461, %v902
        %v904 = vpop.f32.mrb[0].mxu0
        %905 = vmatprep.mubr.f32.mxu0 0.0
        %906 = vmatmul.mubr.f32.gmra.mrb[0].mxu0 %v576
        %v907 = vpop.f32.mrb[0].mxu0
        %v908 = vadd.f32 %v461, %v907
        %v909 = vpop.f32.mrb[0].mxu0
        %910 = vmatprep.mubr.f32.mxu0 0.0
        %911 = vmatmul.mubr.f32.gmra.mrb[0].mxu0 %v579
        %v912 = vpop.f32.mrb[0].mxu0
        %v913 = vadd.f32 %v461, %v912
        %v914 = vpop.f32.mrb[0].mxu0
        %915 = vmatprep.mubr.f32.mxu0 0.0
        %916 = vmatmul.mubr.f32.gmra.mrb[0].mxu0 %v582
        %v917 = vpop.f32.mrb[0].mxu0
        %v918 = vadd.f32 %v461, %v917
        %v919 = vpop.f32.mrb[0].mxu0
        %920 = vmatprep.mubr.f32.mxu0 0.0
        %921 = vmatmul.mubr.f32.gmra.mrb[0].mxu0 %v585
        %v922 = vpop.f32.mrb[0].mxu0
        %v923 = vadd.f32 %v461, %v922
        %v924 = vpop.f32.mrb[0].mxu0
        %925 = vmatprep.mubr.f32.mxu0 0.0
        %926 = vmatmul.mubr.f32.gmra.mrb[0].mxu0 %v588
        %v927 = vpop.f32.mrb[0].mxu0
        %v928 = vadd.f32 %v461, %v927
        %v929 = vpop.f32.mrb[0].mxu0
        %930 = vmatprep.mubr.f32.mxu0 0.0
        %931 = vmatmul.mubr.f32.gmra.mrb[0].mxu0 %v591
        %v932 = vpop.f32.mrb[0].mxu0
        %v933 = vadd.f32 %v461, %v932
        %v934 = vpop.f32.mrb[0].mxu0
        %935 = vmatprep.mubr.f32.mxu0 0.0
        %936 = vmatmul.mubr.f32.gmra.mrb[0].mxu0 %v594
        %v937 = vpop.f32.mrb[0].mxu0
        %v938 = vadd.f32 %v461, %v937
        %v939 = vpop.f32.mrb[0].mxu0
        %940 = vmatprep.mubr.f32.mxu0 0.0
        %941 = vmatmul.mubr.f32.gmra.mrb[0].mxu0 %v597
        %v942 = vpop.f32.mrb[0].mxu0
        %v943 = vadd.f32 %v461, %v942
        %v944 = vpop.f32.mrb[0].mxu0
        %945 = vmatprep.mubr.f32.mxu0 0.0
        %946 = vmatmul.mubr.f32.gmra.mrb[0].mxu0 %v600
        %v947 = vpop.f32.mrb[0].mxu0
        %v948 = vadd.f32 %v461, %v947
        %v949 = vpop.f32.mrb[0].mxu0
        %950 = vmatprep.mubr.f32.mxu0 0.0
        %951 = vmatmul.mubr.f32.gmra.mrb[0].mxu0 %v603
        %v952 = vpop.f32.mrb[0].mxu0
        %v953 = vadd.f32 %v461, %v952
        %v954 = vpop.f32.mrb[0].mxu0
        %955 = vmatprep.mubr.f32.mxu0 0.0
        %956 = vmatmul.mubr.f32.gmra.mrb[0].mxu0 %v606
        %v957 = vpop.f32.mrb[0].mxu0
        %v958 = vadd.f32 %v461, %v957
        %v959 = vpop.f32.mrb[0].mxu0
        %960 = vmatprep.mubr.f32.mxu0 0.0
        %961 = vmatmul.mubr.f32.gmra.mrb[0].mxu0 %v609
        %v962 = vpop.f32.mrb[0].mxu0
        %v963 = vadd.f32 %v461, %v962
        %v964 = vpop.f32.mrb[0].mxu0
        %965 = vmatprep.mubr.f32.mxu0 0.0
        %966 = vmatmul.mubr.f32.gmra.mrb[0].mxu0 %v612
        %v967 = vpop.f32.mrb[0].mxu0
        %v968 = vadd.f32 %v461, %v967
        %v969 = vpop.f32.mrb[0].mxu0
        %970 = vmatprep.mubr.f32.mxu0 0.0
        %971 = vmatmul.mubr.f32.gmra.mrb[0].mxu0 %v615
        %v972 = vpop.f32.mrb[0].mxu0
        %v973 = vadd.f32 %v461, %v972
        %v974 = vpop.f32.mrb[0].mxu0
        %975 = vmatprep.mubr.f32.mxu0 0.0
        %976 = vmatmul.mubr.f32.gmra.mrb[0].mxu0 %v618
        %v977 = vpop.f32.mrb[0].mxu0
        %v978 = vadd.f32 %v461, %v977
        %v979 = vpop.f32.mrb[0].mxu0
        %980 = vmatprep.mubr.f32.mxu0 0.0
        %981 = vmatmul.mubr.f32.gmra.mrb[0].mxu0 %v621
        %v982 = vpop.f32.mrb[0].mxu0
        %v983 = vadd.f32 %v461, %v982
        %v984 = vpop.f32.mrb[0].mxu0
        %985 = vmatprep.mubr.f32.mxu0 0.0
        %986 = vmatmul.mubr.f32.gmra.mrb[0].mxu0 %v624
        %v987 = vpop.f32.mrb[0].mxu0
        %v988 = vadd.f32 %v461, %v987
        %v989 = vpop.f32.mrb[0].mxu0
        %990 = vmatprep.mubr.f32.mxu0 0.0
        %991 = vmatmul.mubr.f32.gmra.mrb[0].mxu0 %v627
        %v992 = vpop.f32.mrb[0].mxu0
        %v993 = vadd.f32 %v461, %v992
        %v994 = vpop.f32.mrb[0].mxu0
        %995 = vmatprep.mubr.f32.mxu0 0.0
        %996 = vmatmul.mubr.f32.gmra.mrb[0].mxu0 %v630
        %v997 = vpop.f32.mrb[0].mxu0
        %v998 = vadd.f32 %v461, %v997
        %v999 = vpop.f32.mrb[0].mxu0
        %1000 = vmatprep.mubr.f32.mxu0 0.0
        %1001 = vmatmul.mubr.f32.gmra.mrb[0].mxu0 %v633
        %v1002 = vpop.f32.mrb[0].mxu0
        %v1003 = vadd.f32 %v461, %v1002
        %v1004 = vpop.f32.mrb[0].mxu0
        %1005 = vmatprep.mubr.f32.mxu0 0.0
        %1006 = vmatmul.mubr.f32.gmra.mrb[0].mxu0 %v636
        %v1007 = vpop.f32.mrb[0].mxu0
        %v1008 = vadd.f32 %v461, %v1007
        %v1009 = vpop.f32.mrb[0].mxu0
        %1010 = vmatprep.mubr.f32.mxu0 0.0
        %1011 = vmatmul.mubr.f32.gmra.mrb[0].mxu0 %v639
        %v1012 = vpop.f32.mrb[0].mxu0
        %v1013 = vadd.f32 %v461, %v1012
        %v1014 = vpop.f32.mrb[0].mxu0
        %1015 = vmatprep.mubr.f32.mxu0 0.0
        %1016 = vmatmul.mubr.f32.gmra.mrb[0].mxu0 %v642
        %v1017 = vpop.f32.mrb[0].mxu0
        %v1018 = vadd.f32 %v461, %v1017
        %v1019 = vpop.f32.mrb[0].mxu0
        %1020 = vmatprep.mubr.f32.mxu0 0.0
        %1021 = vmatmul.mubr.f32.gmra.mrb[0].mxu0 %v645
        %v1022 = vpop.f32.mrb[0].mxu0
        %v1023 = vadd.f32 %v461, %v1022
        %v1024 = vpop.f32.mrb[0].mxu0
        %1025 = vmatprep.mubr.f32.mxu0 0.0
        %1026 = vmatmul.mubr.f32.gmra.mrb[0].mxu0 %v648
        %v1027 = vpop.f32.mrb[0].mxu0
        %v1028 = vadd.f32 %v461, %v1027
        %v1029 = vpop.f32.mrb[0].mxu0
        %1030 = vmatprep.mubr.f32.mxu0 0.0
        %1031 = vmatmul.mubr.f32.gmra.mrb[0].mxu0 %v651
        %v1032 = vpop.f32.mrb[0].mxu0
        %v1033 = vadd.f32 %v461, %v1032
        %v1034 = vpop.f32.mrb[0].mxu0
        %1035 = vmatprep.mubr.f32.mxu0 0.0
        %1036 = vmatmul.mubr.f32.gmra.mrb[0].mxu0 %v654
        %v1037 = vpop.f32.mrb[0].mxu0
        %v1038 = vadd.f32 %v461, %v1037
        %v1039 = vpop.f32.mrb[0].mxu0
        %1040 = vdwg.mxu0
        %v1041 = vmul.f32 %v723, 0.1
        %v1042 = vmul.f32 %v728, 0.1
        %v1043 = vmul.f32 %v733, 0.1
        %v1044 = vmul.f32 %v738, 0.1
        %v1045 = vmul.f32 %v743, 0.1
        %v1046 = vmul.f32 %v748, 0.1
        %v1047 = vmul.f32 %v753, 0.1
        %v1048 = vmul.f32 %v758, 0.1
        %v1049 = vmul.f32 %v763, 0.1
        %v1050 = vmul.f32 %v768, 0.1
        %v1051 = vmul.f32 %v773, 0.1
        %v1052 = vmul.f32 %v778, 0.1
        %v1053 = vmul.f32 %v783, 0.1
        %v1054 = vmul.f32 %v788, 0.1
        %v1055 = vmul.f32 %v793, 0.1
        %v1056 = vmul.f32 %v798, 0.1
        %v1057 = vmul.f32 %v803, 0.1
        %v1058 = vmul.f32 %v808, 0.1
        %v1059 = vmul.f32 %v813, 0.1
        %v1060 = vmul.f32 %v818, 0.1
        %v1061 = vmul.f32 %v823, 0.1
        %v1062 = vmul.f32 %v828, 0.1
        %v1063 = vmul.f32 %v833, 0.1
        %v1064 = vmul.f32 %v838, 0.1
        %v1065 = vmul.f32 %v843, 0.1
        %v1066 = vmul.f32 %v848, 0.1
        %v1067 = vmul.f32 %v853, 0.1
        %v1068 = vmul.f32 %v858, 0.1
        %v1069 = vmul.f32 %v863, 0.1
        %v1070 = vmul.f32 %v868, 0.1
        %v1071 = vmul.f32 %v873, 0.1
        %v1072 = vmul.f32 %v878, 0.1
        %v1073 = vmul.f32 %v883, 0.1
        %v1074 = vmul.f32 %v888, 0.1
        %v1075 = vmul.f32 %v893, 0.1
        %v1076 = vmul.f32 %v898, 0.1
        %v1077 = vmul.f32 %v903, 0.1
        %v1078 = vmul.f32 %v908, 0.1
        %v1079 = vmul.f32 %v913, 0.1
        %v1080 = vmul.f32 %v918, 0.1
        %v1081 = vmul.f32 %v923, 0.1
        %v1082 = vmul.f32 %v928, 0.1
        %v1083 = vmul.f32 %v933, 0.1
        %v1084 = vmul.f32 %v938, 0.1
        %v1085 = vmul.f32 %v943, 0.1
        %v1086 = vmul.f32 %v948, 0.1
        %v1087 = vmul.f32 %v953, 0.1
        %v1088 = vmul.f32 %v958, 0.1
        %v1089 = vmul.f32 %v963, 0.1
        %v1090 = vmul.f32 %v968, 0.1
        %v1091 = vmul.f32 %v973, 0.1
        %v1092 = vmul.f32 %v978, 0.1
        %v1093 = vmul.f32 %v983, 0.1
        %v1094 = vmul.f32 %v988, 0.1
        %v1095 = vmul.f32 %v993, 0.1
        %v1096 = vmul.f32 %v998, 0.1
        %v1097 = vmul.f32 %v1003, 0.1
        %v1098 = vmul.f32 %v1008, 0.1
        %v1099 = vmul.f32 %v1013, 0.1
        %v1100 = vmul.f32 %v1018, 0.1
        %v1101 = vmul.f32 %v1023, 0.1
        %v1102 = vmul.f32 %v1028, 0.1
        %v1103 = vmul.f32 %v1033, 0.1
        %v1104 = vmul.f32 %v1038, 0.1
        %v1105 = vmax.f32 %v723, %v1041
        %v1106 = vmax.f32 %v728, %v1042
        %v1107 = vmax.f32 %v733, %v1043
        %v1108 = vmax.f32 %v738, %v1044
        %v1109 = vmax.f32 %v743, %v1045
        %v1110 = vmax.f32 %v748, %v1046
        %v1111 = vmax.f32 %v753, %v1047
        %v1112 = vmax.f32 %v758, %v1048
        %v1113 = vmax.f32 %v763, %v1049
        %v1114 = vmax.f32 %v768, %v1050
        %v1115 = vmax.f32 %v773, %v1051
        %v1116 = vmax.f32 %v778, %v1052
        %v1117 = vmax.f32 %v783, %v1053
        %v1118 = vmax.f32 %v788, %v1054
        %v1119 = vmax.f32 %v793, %v1055
        %v1120 = vmax.f32 %v798, %v1056
        %v1121 = vmax.f32 %v803, %v1057
        %v1122 = vmax.f32 %v808, %v1058
        %v1123 = vmax.f32 %v813, %v1059
        %v1124 = vmax.f32 %v818, %v1060
        %v1125 = vmax.f32 %v823, %v1061
        %v1126 = vmax.f32 %v828, %v1062
        %v1127 = vmax.f32 %v833, %v1063
        %v1128 = vmax.f32 %v838, %v1064
        %v1129 = vmax.f32 %v843, %v1065
        %v1130 = vmax.f32 %v848, %v1066
        %v1131 = vmax.f32 %v853, %v1067
        %v1132 = vmax.f32 %v858, %v1068
        %v1133 = vmax.f32 %v863, %v1069
        %v1134 = vmax.f32 %v868, %v1070
        %v1135 = vmax.f32 %v873, %v1071
        %v1136 = vmax.f32 %v878, %v1072
        %v1137 = vmax.f32 %v883, %v1073
        %v1138 = vmax.f32 %v888, %v1074
        %v1139 = vmax.f32 %v893, %v1075
        %v1140 = vmax.f32 %v898, %v1076
        %v1141 = vmax.f32 %v903, %v1077
        %v1142 = vmax.f32 %v908, %v1078
        %v1143 = vmax.f32 %v913, %v1079
        %v1144 = vmax.f32 %v918, %v1080
        %v1145 = vmax.f32 %v923, %v1081
        %v1146 = vmax.f32 %v928, %v1082
        %v1147 = vmax.f32 %v933, %v1083
        %v1148 = vmax.f32 %v938, %v1084
        %v1149 = vmax.f32 %v943, %v1085
        %v1150 = vmax.f32 %v948, %v1086
        %v1151 = vmax.f32 %v953, %v1087
        %v1152 = vmax.f32 %v958, %v1088
        %v1153 = vmax.f32 %v963, %v1089
        %v1154 = vmax.f32 %v968, %v1090
        %v1155 = vmax.f32 %v973, %v1091
        %v1156 = vmax.f32 %v978, %v1092
        %v1157 = vmax.f32 %v983, %v1093
        %v1158 = vmax.f32 %v988, %v1094
        %v1159 = vmax.f32 %v993, %v1095
        %v1160 = vmax.f32 %v998, %v1096
        %v1161 = vmax.f32 %v1003, %v1097
        %v1162 = vmax.f32 %v1008, %v1098
        %v1163 = vmax.f32 %v1013, %v1099
        %v1164 = vmax.f32 %v1018, %v1100
        %v1165 = vmax.f32 %v1023, %v1101
        %v1166 = vmax.f32 %v1028, %v1102
        %v1167 = vmax.f32 %v1033, %v1103
        %v1168 = vmax.f32 %v1038, %v1104
        %v1169 = vld [vmem:[%s3] sm:$0xff]
        %v1170 = vld [vmem:[%s3 + $0x8] sm:$0xff]
        %v1171 = vld [vmem:[%s3 + $0x10] sm:$0xff]
        %v1172 = vld [vmem:[%s3 + $0x18] sm:$0xff]
        %v1173 = vld [vmem:[%s4] sm:$0x1]
        %v1175 = vlaneseq
        %v1176 = vshrl.u32 %v1175, 7
        %v1177 = vsub.s32 0, %v1176
        %v1178 = vrot.slane %v1173, %v1177
        %vm1180 = vcmask 261120
        %v1182 = vsel %vm1180, %v1105, 0
        %v1185 = vsel %vm1180, %v1106, 0
        %v1188 = vsel %vm1180, %v1107, 0
        %v1191 = vsel %vm1180, %v1108, 0
        %v1194 = vsel %vm1180, %v1109, 0
        %v1197 = vsel %vm1180, %v1110, 0
        %v1200 = vsel %vm1180, %v1111, 0
        %v1203 = vsel %vm1180, %v1112, 0
        %v1206 = vsel %vm1180, %v1113, 0
        %v1209 = vsel %vm1180, %v1114, 0
        %v1212 = vsel %vm1180, %v1115, 0
        %v1215 = vsel %vm1180, %v1116, 0
        %v1218 = vsel %vm1180, %v1117, 0
        %v1221 = vsel %vm1180, %v1118, 0
        %v1224 = vsel %vm1180, %v1119, 0
        %v1227 = vsel %vm1180, %v1120, 0
        %v1230 = vsel %vm1180, %v1121, 0
        %v1233 = vsel %vm1180, %v1122, 0
        %v1236 = vsel %vm1180, %v1123, 0
        %v1239 = vsel %vm1180, %v1124, 0
        %v1242 = vsel %vm1180, %v1125, 0
        %v1245 = vsel %vm1180, %v1126, 0
        %v1248 = vsel %vm1180, %v1127, 0
        %v1251 = vsel %vm1180, %v1128, 0
        %v1254 = vsel %vm1180, %v1129, 0
        %v1257 = vsel %vm1180, %v1130, 0
        %v1260 = vsel %vm1180, %v1131, 0
        %v1263 = vsel %vm1180, %v1132, 0
        %v1266 = vsel %vm1180, %v1133, 0
        %v1269 = vsel %vm1180, %v1134, 0
        %v1272 = vsel %vm1180, %v1135, 0
        %v1275 = vsel %vm1180, %v1136, 0
        %v1278 = vsel %vm1180, %v1137, 0
        %v1281 = vsel %vm1180, %v1138, 0
        %v1284 = vsel %vm1180, %v1139, 0
        %v1287 = vsel %vm1180, %v1140, 0
        %v1290 = vsel %vm1180, %v1141, 0
        %v1293 = vsel %vm1180, %v1142, 0
        %v1296 = vsel %vm1180, %v1143, 0
        %v1299 = vsel %vm1180, %v1144, 0
        %v1302 = vsel %vm1180, %v1145, 0
        %v1305 = vsel %vm1180, %v1146, 0
        %v1308 = vsel %vm1180, %v1147, 0
        %v1311 = vsel %vm1180, %v1148, 0
        %v1314 = vsel %vm1180, %v1149, 0
        %v1317 = vsel %vm1180, %v1150, 0
        %v1320 = vsel %vm1180, %v1151, 0
        %v1323 = vsel %vm1180, %v1152, 0
        %v1326 = vsel %vm1180, %v1153, 0
        %v1329 = vsel %vm1180, %v1154, 0
        %v1332 = vsel %vm1180, %v1155, 0
        %v1335 = vsel %vm1180, %v1156, 0
        %v1338 = vsel %vm1180, %v1157, 0
        %v1341 = vsel %vm1180, %v1158, 0
        %v1344 = vsel %vm1180, %v1159, 0
        %v1347 = vsel %vm1180, %v1160, 0
        %v1350 = vsel %vm1180, %v1161, 0
        %v1353 = vsel %vm1180, %v1162, 0
        %v1356 = vsel %vm1180, %v1163, 0
        %v1359 = vsel %vm1180, %v1164, 0
        %v1362 = vsel %vm1180, %v1165, 0
        %v1365 = vsel %vm1180, %v1166, 0
        %v1368 = vsel %vm1180, %v1167, 0
        %v1371 = vsel %vm1180, %v1168, 0
        %1373 = vmatprep.subr.mxu0 0.0
        %1374 = vmatpush1.msra.mxu0 %v1169
        %1375 = vmatprep.subr.mxu0 0.0
        %1376 = vmatpush1.msra.mxu0 %v1170
        %1377 = vmatprep.subr.mxu0 0.0
        %1378 = vmatpush1.msra.mxu0 %v1171
        %1379 = vmatprep.subr.mxu0 0.0
        %1380 = vmatpush1.msra.mxu0 %v1172
        %1381 = vmatprep.subr.mxu0 0.0
        %1382 = vmatpush1.msra.mxu0 0.0
        %1383 = vmatprep.subr.mxu0 0.0
        %1384 = vmatpush1.msra.mxu0 0.0
        %1385 = vmatprep.subr.mxu0 0.0
        %1386 = vmatpush1.msra.mxu0 0.0
        %1387 = vmatprep.subr.mxu0 0.0
        %1388 = vmatpush1.msra.mxu0 0.0
        %1389 = vmatprep.subr.mxu0 0.0
        %1390 = vmatpush1.msra.mxu0 0.0
        %1391 = vmatprep.subr.mxu0 0.0
        %1392 = vmatpush1.msra.mxu0 0.0
        %1393 = vmatprep.subr.mxu0 0.0
        %1394 = vmatpush1.msra.mxu0 0.0
        %1395 = vmatprep.subr.mxu0 0.0
        %1396 = vmatpush1.msra.mxu0 0.0
        %1397 = vmatprep.subr.mxu0 0.0
        %1398 = vmatpush1.msra.mxu0 0.0
        %1399 = vmatprep.subr.mxu0 0.0
        %1400 = vmatpush1.msra.mxu0 0.0
        %1401 = vmatprep.subr.mxu0 0.0
        %1402 = vmatpush1.msra.mxu0 0.0
        %1403 = vmatprep.subr.mxu0 0.0
        %1404 = vmatpush1.msra.mxu0 0.0
        %1405 = vmatprep.subr.mxu0 0.0
        %1406 = vmatpush1.msra.mxu0 0.0
        %1407 = vmatprep.subr.mxu0 0.0
        %1408 = vmatpush1.msra.mxu0 0.0
        %1409 = vmatprep.subr.mxu0 0.0
        %1410 = vmatpush1.msra.mxu0 0.0
        %1411 = vmatprep.subr.mxu0 0.0
        %1412 = vmatpush1.msra.mxu0 0.0
        %1413 = vmatprep.subr.mxu0 0.0
        %1414 = vmatpush1.msra.mxu0 0.0
        %1415 = vmatprep.subr.mxu0 0.0
        %1416 = vmatpush1.msra.mxu0 0.0
        %1417 = vmatprep.subr.mxu0 0.0
        %1418 = vmatpush1.msra.mxu0 0.0
        %1419 = vmatprep.subr.mxu0 0.0
        %1420 = vmatpush1.msra.mxu0 0.0
        %1421 = vmatprep.subr.mxu0 0.0
        %1422 = vmatpush1.msra.mxu0 0.0
        %1423 = vmatprep.subr.mxu0 0.0
        %1424 = vmatpush1.msra.mxu0 0.0
        %1425 = vmatprep.subr.mxu0 0.0
        %1426 = vmatpush1.msra.mxu0 0.0
        %1427 = vmatprep.subr.mxu0 0.0
        %1428 = vmatpush1.msra.mxu0 0.0
        %1429 = vmatprep.subr.mxu0 0.0
        %1430 = vmatpush1.msra.mxu0 0.0
        %1431 = vmatprep.subr.mxu0 0.0
        %1432 = vmatpush1.msra.mxu0 0.0
        %1433 = vmatprep.subr.mxu0 0.0
        %1434 = vmatpush1.msra.mxu0 0.0
        %1435 = vmatprep.subr.mxu0 0.0
        %1436 = vmatpush1.msra.mxu0 0.0
        %1437 = vmatprep.mubr.f32.mxu0 0.0
        %1438 = vmatmul.mubr.f32.gmra.mrb[0].mxu0 %v1182
        %v1439 = vpop.f32.mrb[0].mxu0
        %v1440 = vadd.f32 %v1178, %v1439
        %v1441 = vpop.f32.mrb[0].mxu0
        %1442 = vmatprep.mubr.f32.mxu0 0.0
        %1443 = vmatmul.mubr.f32.gmra.mrb[0].mxu0 %v1185
        %v1444 = vpop.f32.mrb[0].mxu0
        %v1445 = vadd.f32 %v1178, %v1444
        %v1446 = vpop.f32.mrb[0].mxu0
        %1447 = vmatprep.mubr.f32.mxu0 0.0
        %1448 = vmatmul.mubr.f32.gmra.mrb[0].mxu0 %v1188
        %v1449 = vpop.f32.mrb[0].mxu0
        %v1450 = vadd.f32 %v1178, %v1449
        %v1451 = vpop.f32.mrb[0].mxu0
        %1452 = vmatprep.mubr.f32.mxu0 0.0
        %1453 = vmatmul.mubr.f32.gmra.mrb[0].mxu0 %v1191
        %v1454 = vpop.f32.mrb[0].mxu0
        %v1455 = vadd.f32 %v1178, %v1454
        %v1456 = vpop.f32.mrb[0].mxu0
        %1457 = vmatprep.mubr.f32.mxu0 0.0
        %1458 = vmatmul.mubr.f32.gmra.mrb[0].mxu0 %v1194
        %v1459 = vpop.f32.mrb[0].mxu0
        %v1460 = vadd.f32 %v1178, %v1459
        %v1461 = vpop.f32.mrb[0].mxu0
        %1462 = vmatprep.mubr.f32.mxu0 0.0
        %1463 = vmatmul.mubr.f32.gmra.mrb[0].mxu0 %v1197
        %v1464 = vpop.f32.mrb[0].mxu0
        %v1465 = vadd.f32 %v1178, %v1464
        %v1466 = vpop.f32.mrb[0].mxu0
        %1467 = vmatprep.mubr.f32.mxu0 0.0
        %1468 = vmatmul.mubr.f32.gmra.mrb[0].mxu0 %v1200
        %v1469 = vpop.f32.mrb[0].mxu0
        %v1470 = vadd.f32 %v1178, %v1469
        %v1471 = vpop.f32.mrb[0].mxu0
        %1472 = vmatprep.mubr.f32.mxu0 0.0
        %1473 = vmatmul.mubr.f32.gmra.mrb[0].mxu0 %v1203
        %v1474 = vpop.f32.mrb[0].mxu0
        %v1475 = vadd.f32 %v1178, %v1474
        %v1476 = vpop.f32.mrb[0].mxu0
        %1477 = vmatprep.mubr.f32.mxu0 0.0
        %1478 = vmatmul.mubr.f32.gmra.mrb[0].mxu0 %v1206
        %v1479 = vpop.f32.mrb[0].mxu0
        %v1480 = vadd.f32 %v1178, %v1479
        %v1481 = vpop.f32.mrb[0].mxu0
        %1482 = vmatprep.mubr.f32.mxu0 0.0
        %1483 = vmatmul.mubr.f32.gmra.mrb[0].mxu0 %v1209
        %v1484 = vpop.f32.mrb[0].mxu0
        %v1485 = vadd.f32 %v1178, %v1484
        %v1486 = vpop.f32.mrb[0].mxu0
        %1487 = vmatprep.mubr.f32.mxu0 0.0
        %1488 = vmatmul.mubr.f32.gmra.mrb[0].mxu0 %v1212
        %v1489 = vpop.f32.mrb[0].mxu0
        %v1490 = vadd.f32 %v1178, %v1489
        %v1491 = vpop.f32.mrb[0].mxu0
        %1492 = vmatprep.mubr.f32.mxu0 0.0
        %1493 = vmatmul.mubr.f32.gmra.mrb[0].mxu0 %v1215
        %v1494 = vpop.f32.mrb[0].mxu0
        %v1495 = vadd.f32 %v1178, %v1494
        %v1496 = vpop.f32.mrb[0].mxu0
        %1497 = vmatprep.mubr.f32.mxu0 0.0
        %1498 = vmatmul.mubr.f32.gmra.mrb[0].mxu0 %v1218
        %v1499 = vpop.f32.mrb[0].mxu0
        %v1500 = vadd.f32 %v1178, %v1499
        %v1501 = vpop.f32.mrb[0].mxu0
        %1502 = vmatprep.mubr.f32.mxu0 0.0
        %1503 = vmatmul.mubr.f32.gmra.mrb[0].mxu0 %v1221
        %v1504 = vpop.f32.mrb[0].mxu0
        %v1505 = vadd.f32 %v1178, %v1504
        %v1506 = vpop.f32.mrb[0].mxu0
        %1507 = vmatprep.mubr.f32.mxu0 0.0
        %1508 = vmatmul.mubr.f32.gmra.mrb[0].mxu0 %v1224
        %v1509 = vpop.f32.mrb[0].mxu0
        %v1510 = vadd.f32 %v1178, %v1509
        %v1511 = vpop.f32.mrb[0].mxu0
        %1512 = vmatprep.mubr.f32.mxu0 0.0
        %1513 = vmatmul.mubr.f32.gmra.mrb[0].mxu0 %v1227
        %v1514 = vpop.f32.mrb[0].mxu0
        %v1515 = vadd.f32 %v1178, %v1514
        %v1516 = vpop.f32.mrb[0].mxu0
        %1517 = vmatprep.mubr.f32.mxu0 0.0
        %1518 = vmatmul.mubr.f32.gmra.mrb[0].mxu0 %v1230
        %v1519 = vpop.f32.mrb[0].mxu0
        %v1520 = vadd.f32 %v1178, %v1519
        %v1521 = vpop.f32.mrb[0].mxu0
        %1522 = vmatprep.mubr.f32.mxu0 0.0
        %1523 = vmatmul.mubr.f32.gmra.mrb[0].mxu0 %v1233
        %v1524 = vpop.f32.mrb[0].mxu0
        %v1525 = vadd.f32 %v1178, %v1524
        %v1526 = vpop.f32.mrb[0].mxu0
        %1527 = vmatprep.mubr.f32.mxu0 0.0
        %1528 = vmatmul.mubr.f32.gmra.mrb[0].mxu0 %v1236
        %v1529 = vpop.f32.mrb[0].mxu0
        %v1530 = vadd.f32 %v1178, %v1529
        %v1531 = vpop.f32.mrb[0].mxu0
        %1532 = vmatprep.mubr.f32.mxu0 0.0
        %1533 = vmatmul.mubr.f32.gmra.mrb[0].mxu0 %v1239
        %v1534 = vpop.f32.mrb[0].mxu0
        %v1535 = vadd.f32 %v1178, %v1534
        %v1536 = vpop.f32.mrb[0].mxu0
        %1537 = vmatprep.mubr.f32.mxu0 0.0
        %1538 = vmatmul.mubr.f32.gmra.mrb[0].mxu0 %v1242
        %v1539 = vpop.f32.mrb[0].mxu0
        %v1540 = vadd.f32 %v1178, %v1539
        %v1541 = vpop.f32.mrb[0].mxu0
        %1542 = vmatprep.mubr.f32.mxu0 0.0
        %1543 = vmatmul.mubr.f32.gmra.mrb[0].mxu0 %v1245
        %v1544 = vpop.f32.mrb[0].mxu0
        %v1545 = vadd.f32 %v1178, %v1544
        %v1546 = vpop.f32.mrb[0].mxu0
        %1547 = vmatprep.mubr.f32.mxu0 0.0
        %1548 = vmatmul.mubr.f32.gmra.mrb[0].mxu0 %v1248
        %v1549 = vpop.f32.mrb[0].mxu0
        %v1550 = vadd.f32 %v1178, %v1549
        %v1551 = vpop.f32.mrb[0].mxu0
        %1552 = vmatprep.mubr.f32.mxu0 0.0
        %1553 = vmatmul.mubr.f32.gmra.mrb[0].mxu0 %v1251
        %v1554 = vpop.f32.mrb[0].mxu0
        %v1555 = vadd.f32 %v1178, %v1554
        %v1556 = vpop.f32.mrb[0].mxu0
        %1557 = vmatprep.mubr.f32.mxu0 0.0
        %1558 = vmatmul.mubr.f32.gmra.mrb[0].mxu0 %v1254
        %v1559 = vpop.f32.mrb[0].mxu0
        %v1560 = vadd.f32 %v1178, %v1559
        %v1561 = vpop.f32.mrb[0].mxu0
        %1562 = vmatprep.mubr.f32.mxu0 0.0
        %1563 = vmatmul.mubr.f32.gmra.mrb[0].mxu0 %v1257
        %v1564 = vpop.f32.mrb[0].mxu0
        %v1565 = vadd.f32 %v1178, %v1564
        %v1566 = vpop.f32.mrb[0].mxu0
        %1567 = vmatprep.mubr.f32.mxu0 0.0
        %1568 = vmatmul.mubr.f32.gmra.mrb[0].mxu0 %v1260
        %v1569 = vpop.f32.mrb[0].mxu0
        %v1570 = vadd.f32 %v1178, %v1569
        %v1571 = vpop.f32.mrb[0].mxu0
        %1572 = vmatprep.mubr.f32.mxu0 0.0
        %1573 = vmatmul.mubr.f32.gmra.mrb[0].mxu0 %v1263
        %v1574 = vpop.f32.mrb[0].mxu0
        %v1575 = vadd.f32 %v1178, %v1574
        %v1576 = vpop.f32.mrb[0].mxu0
        %1577 = vmatprep.mubr.f32.mxu0 0.0
        %1578 = vmatmul.mubr.f32.gmra.mrb[0].mxu0 %v1266
        %v1579 = vpop.f32.mrb[0].mxu0
        %v1580 = vadd.f32 %v1178, %v1579
        %v1581 = vpop.f32.mrb[0].mxu0
        %1582 = vmatprep.mubr.f32.mxu0 0.0
        %1583 = vmatmul.mubr.f32.gmra.mrb[0].mxu0 %v1269
        %v1584 = vpop.f32.mrb[0].mxu0
        %v1585 = vadd.f32 %v1178, %v1584
        %v1586 = vpop.f32.mrb[0].mxu0
        %1587 = vmatprep.mubr.f32.mxu0 0.0
        %1588 = vmatmul.mubr.f32.gmra.mrb[0].mxu0 %v1272
        %v1589 = vpop.f32.mrb[0].mxu0
        %v1590 = vadd.f32 %v1178, %v1589
        %v1591 = vpop.f32.mrb[0].mxu0
        %1592 = vmatprep.mubr.f32.mxu0 0.0
        %1593 = vmatmul.mubr.f32.gmra.mrb[0].mxu0 %v1275
        %v1594 = vpop.f32.mrb[0].mxu0
        %v1595 = vadd.f32 %v1178, %v1594
        %v1596 = vpop.f32.mrb[0].mxu0
        %1597 = vmatprep.mubr.f32.mxu0 0.0
        %1598 = vmatmul.mubr.f32.gmra.mrb[0].mxu0 %v1278
        %v1599 = vpop.f32.mrb[0].mxu0
        %v1600 = vadd.f32 %v1178, %v1599
        %v1601 = vpop.f32.mrb[0].mxu0
        %1602 = vmatprep.mubr.f32.mxu0 0.0
        %1603 = vmatmul.mubr.f32.gmra.mrb[0].mxu0 %v1281
        %v1604 = vpop.f32.mrb[0].mxu0
        %v1605 = vadd.f32 %v1178, %v1604
        %v1606 = vpop.f32.mrb[0].mxu0
        %1607 = vmatprep.mubr.f32.mxu0 0.0
        %1608 = vmatmul.mubr.f32.gmra.mrb[0].mxu0 %v1284
        %v1609 = vpop.f32.mrb[0].mxu0
        %v1610 = vadd.f32 %v1178, %v1609
        %v1611 = vpop.f32.mrb[0].mxu0
        %1612 = vmatprep.mubr.f32.mxu0 0.0
        %1613 = vmatmul.mubr.f32.gmra.mrb[0].mxu0 %v1287
        %v1614 = vpop.f32.mrb[0].mxu0
        %v1615 = vadd.f32 %v1178, %v1614
        %v1616 = vpop.f32.mrb[0].mxu0
        %1617 = vmatprep.mubr.f32.mxu0 0.0
        %1618 = vmatmul.mubr.f32.gmra.mrb[0].mxu0 %v1290
        %v1619 = vpop.f32.mrb[0].mxu0
        %v1620 = vadd.f32 %v1178, %v1619
        %v1621 = vpop.f32.mrb[0].mxu0
        %1622 = vmatprep.mubr.f32.mxu0 0.0
        %1623 = vmatmul.mubr.f32.gmra.mrb[0].mxu0 %v1293
        %v1624 = vpop.f32.mrb[0].mxu0
        %v1625 = vadd.f32 %v1178, %v1624
        %v1626 = vpop.f32.mrb[0].mxu0
        %1627 = vmatprep.mubr.f32.mxu0 0.0
        %1628 = vmatmul.mubr.f32.gmra.mrb[0].mxu0 %v1296
        %v1629 = vpop.f32.mrb[0].mxu0
        %v1630 = vadd.f32 %v1178, %v1629
        %v1631 = vpop.f32.mrb[0].mxu0
        %1632 = vmatprep.mubr.f32.mxu0 0.0
        %1633 = vmatmul.mubr.f32.gmra.mrb[0].mxu0 %v1299
        %v1634 = vpop.f32.mrb[0].mxu0
        %v1635 = vadd.f32 %v1178, %v1634
        %v1636 = vpop.f32.mrb[0].mxu0
        %1637 = vmatprep.mubr.f32.mxu0 0.0
        %1638 = vmatmul.mubr.f32.gmra.mrb[0].mxu0 %v1302
        %v1639 = vpop.f32.mrb[0].mxu0
        %v1640 = vadd.f32 %v1178, %v1639
        %v1641 = vpop.f32.mrb[0].mxu0
        %1642 = vmatprep.mubr.f32.mxu0 0.0
        %1643 = vmatmul.mubr.f32.gmra.mrb[0].mxu0 %v1305
        %v1644 = vpop.f32.mrb[0].mxu0
        %v1645 = vadd.f32 %v1178, %v1644
        %v1646 = vpop.f32.mrb[0].mxu0
        %1647 = vmatprep.mubr.f32.mxu0 0.0
        %1648 = vmatmul.mubr.f32.gmra.mrb[0].mxu0 %v1308
        %v1649 = vpop.f32.mrb[0].mxu0
        %v1650 = vadd.f32 %v1178, %v1649
        %v1651 = vpop.f32.mrb[0].mxu0
        %1652 = vmatprep.mubr.f32.mxu0 0.0
        %1653 = vmatmul.mubr.f32.gmra.mrb[0].mxu0 %v1311
        %v1654 = vpop.f32.mrb[0].mxu0
        %v1655 = vadd.f32 %v1178, %v1654
        %v1656 = vpop.f32.mrb[0].mxu0
        %1657 = vmatprep.mubr.f32.mxu0 0.0
        %1658 = vmatmul.mubr.f32.gmra.mrb[0].mxu0 %v1314
        %v1659 = vpop.f32.mrb[0].mxu0
        %v1660 = vadd.f32 %v1178, %v1659
        %v1661 = vpop.f32.mrb[0].mxu0
        %1662 = vmatprep.mubr.f32.mxu0 0.0
        %1663 = vmatmul.mubr.f32.gmra.mrb[0].mxu0 %v1317
        %v1664 = vpop.f32.mrb[0].mxu0
        %v1665 = vadd.f32 %v1178, %v1664
        %v1666 = vpop.f32.mrb[0].mxu0
        %1667 = vmatprep.mubr.f32.mxu0 0.0
        %1668 = vmatmul.mubr.f32.gmra.mrb[0].mxu0 %v1320
        %v1669 = vpop.f32.mrb[0].mxu0
        %v1670 = vadd.f32 %v1178, %v1669
        %v1671 = vpop.f32.mrb[0].mxu0
        %1672 = vmatprep.mubr.f32.mxu0 0.0
        %1673 = vmatmul.mubr.f32.gmra.mrb[0].mxu0 %v1323
        %v1674 = vpop.f32.mrb[0].mxu0
        %v1675 = vadd.f32 %v1178, %v1674
        %v1676 = vpop.f32.mrb[0].mxu0
        %1677 = vmatprep.mubr.f32.mxu0 0.0
        %1678 = vmatmul.mubr.f32.gmra.mrb[0].mxu0 %v1326
        %v1679 = vpop.f32.mrb[0].mxu0
        %v1680 = vadd.f32 %v1178, %v1679
        %v1681 = vpop.f32.mrb[0].mxu0
        %1682 = vmatprep.mubr.f32.mxu0 0.0
        %1683 = vmatmul.mubr.f32.gmra.mrb[0].mxu0 %v1329
        %v1684 = vpop.f32.mrb[0].mxu0
        %v1685 = vadd.f32 %v1178, %v1684
        %v1686 = vpop.f32.mrb[0].mxu0
        %1687 = vmatprep.mubr.f32.mxu0 0.0
        %1688 = vmatmul.mubr.f32.gmra.mrb[0].mxu0 %v1332
        %v1689 = vpop.f32.mrb[0].mxu0
        %v1690 = vadd.f32 %v1178, %v1689
        %v1691 = vpop.f32.mrb[0].mxu0
        %1692 = vmatprep.mubr.f32.mxu0 0.0
        %1693 = vmatmul.mubr.f32.gmra.mrb[0].mxu0 %v1335
        %v1694 = vpop.f32.mrb[0].mxu0
        %v1695 = vadd.f32 %v1178, %v1694
        %v1696 = vpop.f32.mrb[0].mxu0
        %1697 = vmatprep.mubr.f32.mxu0 0.0
        %1698 = vmatmul.mubr.f32.gmra.mrb[0].mxu0 %v1338
        %v1699 = vpop.f32.mrb[0].mxu0
        %v1700 = vadd.f32 %v1178, %v1699
        %v1701 = vpop.f32.mrb[0].mxu0
        %1702 = vmatprep.mubr.f32.mxu0 0.0
        %1703 = vmatmul.mubr.f32.gmra.mrb[0].mxu0 %v1341
        %v1704 = vpop.f32.mrb[0].mxu0
        %v1705 = vadd.f32 %v1178, %v1704
        %v1706 = vpop.f32.mrb[0].mxu0
        %1707 = vmatprep.mubr.f32.mxu0 0.0
        %1708 = vmatmul.mubr.f32.gmra.mrb[0].mxu0 %v1344
        %v1709 = vpop.f32.mrb[0].mxu0
        %v1710 = vadd.f32 %v1178, %v1709
        %v1711 = vpop.f32.mrb[0].mxu0
        %1712 = vmatprep.mubr.f32.mxu0 0.0
        %1713 = vmatmul.mubr.f32.gmra.mrb[0].mxu0 %v1347
        %v1714 = vpop.f32.mrb[0].mxu0
        %v1715 = vadd.f32 %v1178, %v1714
        %v1716 = vpop.f32.mrb[0].mxu0
        %1717 = vmatprep.mubr.f32.mxu0 0.0
        %1718 = vmatmul.mubr.f32.gmra.mrb[0].mxu0 %v1350
        %v1719 = vpop.f32.mrb[0].mxu0
        %v1720 = vadd.f32 %v1178, %v1719
        %v1721 = vpop.f32.mrb[0].mxu0
        %1722 = vmatprep.mubr.f32.mxu0 0.0
        %1723 = vmatmul.mubr.f32.gmra.mrb[0].mxu0 %v1353
        %v1724 = vpop.f32.mrb[0].mxu0
        %v1725 = vadd.f32 %v1178, %v1724
        %v1726 = vpop.f32.mrb[0].mxu0
        %1727 = vmatprep.mubr.f32.mxu0 0.0
        %1728 = vmatmul.mubr.f32.gmra.mrb[0].mxu0 %v1356
        %v1729 = vpop.f32.mrb[0].mxu0
        %v1730 = vadd.f32 %v1178, %v1729
        %v1731 = vpop.f32.mrb[0].mxu0
        %1732 = vmatprep.mubr.f32.mxu0 0.0
        %1733 = vmatmul.mubr.f32.gmra.mrb[0].mxu0 %v1359
        %v1734 = vpop.f32.mrb[0].mxu0
        %v1735 = vadd.f32 %v1178, %v1734
        %v1736 = vpop.f32.mrb[0].mxu0
        %1737 = vmatprep.mubr.f32.mxu0 0.0
        %1738 = vmatmul.mubr.f32.gmra.mrb[0].mxu0 %v1362
        %v1739 = vpop.f32.mrb[0].mxu0
        %v1740 = vadd.f32 %v1178, %v1739
        %v1741 = vpop.f32.mrb[0].mxu0
        %1742 = vmatprep.mubr.f32.mxu0 0.0
        %1743 = vmatmul.mubr.f32.gmra.mrb[0].mxu0 %v1365
        %v1744 = vpop.f32.mrb[0].mxu0
        %v1745 = vadd.f32 %v1178, %v1744
        %v1746 = vpop.f32.mrb[0].mxu0
        %1747 = vmatprep.mubr.f32.mxu0 0.0
        %1748 = vmatmul.mubr.f32.gmra.mrb[0].mxu0 %v1368
        %v1749 = vpop.f32.mrb[0].mxu0
        %v1750 = vadd.f32 %v1178, %v1749
        %v1751 = vpop.f32.mrb[0].mxu0
        %1752 = vmatprep.mubr.f32.mxu0 0.0
        %1753 = vmatmul.mubr.f32.gmra.mrb[0].mxu0 %v1371
        %v1754 = vpop.f32.mrb[0].mxu0
        %v1755 = vadd.f32 %v1178, %v1754
        %v1756 = vpop.f32.mrb[0].mxu0
        %1757 = vdwg.mxu0
        %v1758 = vmul.f32 %v1440, 0.1
        %v1759 = vmul.f32 %v1445, 0.1
        %v1760 = vmul.f32 %v1450, 0.1
        %v1761 = vmul.f32 %v1455, 0.1
        %v1762 = vmul.f32 %v1460, 0.1
        %v1763 = vmul.f32 %v1465, 0.1
        %v1764 = vmul.f32 %v1470, 0.1
        %v1765 = vmul.f32 %v1475, 0.1
        %v1766 = vmul.f32 %v1480, 0.1
        %v1767 = vmul.f32 %v1485, 0.1
        %v1768 = vmul.f32 %v1490, 0.1
        %v1769 = vmul.f32 %v1495, 0.1
        %v1770 = vmul.f32 %v1500, 0.1
        %v1771 = vmul.f32 %v1505, 0.1
        %v1772 = vmul.f32 %v1510, 0.1
        %v1773 = vmul.f32 %v1515, 0.1
        %v1774 = vmul.f32 %v1520, 0.1
        %v1775 = vmul.f32 %v1525, 0.1
        %v1776 = vmul.f32 %v1530, 0.1
        %v1777 = vmul.f32 %v1535, 0.1
        %v1778 = vmul.f32 %v1540, 0.1
        %v1779 = vmul.f32 %v1545, 0.1
        %v1780 = vmul.f32 %v1550, 0.1
        %v1781 = vmul.f32 %v1555, 0.1
        %v1782 = vmul.f32 %v1560, 0.1
        %v1783 = vmul.f32 %v1565, 0.1
        %v1784 = vmul.f32 %v1570, 0.1
        %v1785 = vmul.f32 %v1575, 0.1
        %v1786 = vmul.f32 %v1580, 0.1
        %v1787 = vmul.f32 %v1585, 0.1
        %v1788 = vmul.f32 %v1590, 0.1
        %v1789 = vmul.f32 %v1595, 0.1
        %v1790 = vmul.f32 %v1600, 0.1
        %v1791 = vmul.f32 %v1605, 0.1
        %v1792 = vmul.f32 %v1610, 0.1
        %v1793 = vmul.f32 %v1615, 0.1
        %v1794 = vmul.f32 %v1620, 0.1
        %v1795 = vmul.f32 %v1625, 0.1
        %v1796 = vmul.f32 %v1630, 0.1
        %v1797 = vmul.f32 %v1635, 0.1
        %v1798 = vmul.f32 %v1640, 0.1
        %v1799 = vmul.f32 %v1645, 0.1
        %v1800 = vmul.f32 %v1650, 0.1
        %v1801 = vmul.f32 %v1655, 0.1
        %v1802 = vmul.f32 %v1660, 0.1
        %v1803 = vmul.f32 %v1665, 0.1
        %v1804 = vmul.f32 %v1670, 0.1
        %v1805 = vmul.f32 %v1675, 0.1
        %v1806 = vmul.f32 %v1680, 0.1
        %v1807 = vmul.f32 %v1685, 0.1
        %v1808 = vmul.f32 %v1690, 0.1
        %v1809 = vmul.f32 %v1695, 0.1
        %v1810 = vmul.f32 %v1700, 0.1
        %v1811 = vmul.f32 %v1705, 0.1
        %v1812 = vmul.f32 %v1710, 0.1
        %v1813 = vmul.f32 %v1715, 0.1
        %v1814 = vmul.f32 %v1720, 0.1
        %v1815 = vmul.f32 %v1725, 0.1
        %v1816 = vmul.f32 %v1730, 0.1
        %v1817 = vmul.f32 %v1735, 0.1
        %v1818 = vmul.f32 %v1740, 0.1
        %v1819 = vmul.f32 %v1745, 0.1
        %v1820 = vmul.f32 %v1750, 0.1
        %v1821 = vmul.f32 %v1755, 0.1
        %v1822 = vmax.f32 %v1440, %v1758
        %v1823 = vmax.f32 %v1445, %v1759
        %v1824 = vmax.f32 %v1450, %v1760
        %v1825 = vmax.f32 %v1455, %v1761
        %v1826 = vmax.f32 %v1460, %v1762
        %v1827 = vmax.f32 %v1465, %v1763
        %v1828 = vmax.f32 %v1470, %v1764
        %v1829 = vmax.f32 %v1475, %v1765
        %v1830 = vmax.f32 %v1480, %v1766
        %v1831 = vmax.f32 %v1485, %v1767
        %v1832 = vmax.f32 %v1490, %v1768
        %v1833 = vmax.f32 %v1495, %v1769
        %v1834 = vmax.f32 %v1500, %v1770
        %v1835 = vmax.f32 %v1505, %v1771
        %v1836 = vmax.f32 %v1510, %v1772
        %v1837 = vmax.f32 %v1515, %v1773
        %v1838 = vmax.f32 %v1520, %v1774
        %v1839 = vmax.f32 %v1525, %v1775
        %v1840 = vmax.f32 %v1530, %v1776
        %v1841 = vmax.f32 %v1535, %v1777
        %v1842 = vmax.f32 %v1540, %v1778
        %v1843 = vmax.f32 %v1545, %v1779
        %v1844 = vmax.f32 %v1550, %v1780
        %v1845 = vmax.f32 %v1555, %v1781
        %v1846 = vmax.f32 %v1560, %v1782
        %v1847 = vmax.f32 %v1565, %v1783
        %v1848 = vmax.f32 %v1570, %v1784
        %v1849 = vmax.f32 %v1575, %v1785
        %v1850 = vmax.f32 %v1580, %v1786
        %v1851 = vmax.f32 %v1585, %v1787
        %v1852 = vmax.f32 %v1590, %v1788
        %v1853 = vmax.f32 %v1595, %v1789
        %v1854 = vmax.f32 %v1600, %v1790
        %v1855 = vmax.f32 %v1605, %v1791
        %v1856 = vmax.f32 %v1610, %v1792
        %v1857 = vmax.f32 %v1615, %v1793
        %v1858 = vmax.f32 %v1620, %v1794
        %v1859 = vmax.f32 %v1625, %v1795
        %v1860 = vmax.f32 %v1630, %v1796
        %v1861 = vmax.f32 %v1635, %v1797
        %v1862 = vmax.f32 %v1640, %v1798
        %v1863 = vmax.f32 %v1645, %v1799
        %v1864 = vmax.f32 %v1650, %v1800
        %v1865 = vmax.f32 %v1655, %v1801
        %v1866 = vmax.f32 %v1660, %v1802
        %v1867 = vmax.f32 %v1665, %v1803
        %v1868 = vmax.f32 %v1670, %v1804
        %v1869 = vmax.f32 %v1675, %v1805
        %v1870 = vmax.f32 %v1680, %v1806
        %v1871 = vmax.f32 %v1685, %v1807
        %v1872 = vmax.f32 %v1690, %v1808
        %v1873 = vmax.f32 %v1695, %v1809
        %v1874 = vmax.f32 %v1700, %v1810
        %v1875 = vmax.f32 %v1705, %v1811
        %v1876 = vmax.f32 %v1710, %v1812
        %v1877 = vmax.f32 %v1715, %v1813
        %v1878 = vmax.f32 %v1720, %v1814
        %v1879 = vmax.f32 %v1725, %v1815
        %v1880 = vmax.f32 %v1730, %v1816
        %v1881 = vmax.f32 %v1735, %v1817
        %v1882 = vmax.f32 %v1740, %v1818
        %v1883 = vmax.f32 %v1745, %v1819
        %v1884 = vmax.f32 %v1750, %v1820
        %v1885 = vmax.f32 %v1755, %v1821
        %v1886 = vmax.f32 %v1822, %v1838
        %v1887 = vmax.f32 %v1823, %v1839
        %v1888 = vmax.f32 %v1824, %v1840
        %v1889 = vmax.f32 %v1825, %v1841
        %v1890 = vmax.f32 %v1826, %v1842
        %v1891 = vmax.f32 %v1827, %v1843
        %v1892 = vmax.f32 %v1828, %v1844
        %v1893 = vmax.f32 %v1829, %v1845
        %v1894 = vmax.f32 %v1830, %v1846
        %v1895 = vmax.f32 %v1831, %v1847
        %v1896 = vmax.f32 %v1832, %v1848
        %v1897 = vmax.f32 %v1833, %v1849
        %v1898 = vmax.f32 %v1834, %v1850
        %v1899 = vmax.f32 %v1835, %v1851
        %v1900 = vmax.f32 %v1836, %v1852
        %v1901 = vmax.f32 %v1837, %v1853
        %v1902 = vmax.f32 %v1854, %v1870
        %v1903 = vmax.f32 %v1855, %v1871
        %v1904 = vmax.f32 %v1856, %v1872
        %v1905 = vmax.f32 %v1857, %v1873
        %v1906 = vmax.f32 %v1858, %v1874
        %v1907 = vmax.f32 %v1859, %v1875
        %v1908 = vmax.f32 %v1860, %v1876
        %v1909 = vmax.f32 %v1861, %v1877
        %v1910 = vmax.f32 %v1862, %v1878
        %v1911 = vmax.f32 %v1863, %v1879
        %v1912 = vmax.f32 %v1864, %v1880
        %v1913 = vmax.f32 %v1865, %v1881
        %v1914 = vmax.f32 %v1866, %v1882
        %v1915 = vmax.f32 %v1867, %v1883
        %v1916 = vmax.f32 %v1868, %v1884
        %v1917 = vmax.f32 %v1869, %v1885
        %v1918 = vmax.f32 %v1886, %v1902
        %v1919 = vmax.f32 %v1887, %v1903
        %v1920 = vmax.f32 %v1888, %v1904
        %v1921 = vmax.f32 %v1889, %v1905
        %v1922 = vmax.f32 %v1890, %v1906
        %v1923 = vmax.f32 %v1891, %v1907
        %v1924 = vmax.f32 %v1892, %v1908
        %v1925 = vmax.f32 %v1893, %v1909
        %v1926 = vmax.f32 %v1894, %v1910
        %v1927 = vmax.f32 %v1895, %v1911
        %v1928 = vmax.f32 %v1896, %v1912
        %v1929 = vmax.f32 %v1897, %v1913
        %v1930 = vmax.f32 %v1898, %v1914
        %v1931 = vmax.f32 %v1899, %v1915
        %v1932 = vmax.f32 %v1900, %v1916
        %v1933 = vmax.f32 %v1901, %v1917
        %v1934 = vld [vmem:[%s5] sm:$0xff]
        %v1935 = vld [vmem:[%s5 + $0x8] sm:$0xff]
        %v1936 = vld [vmem:[%s5 + $0x10] sm:$0xff]
        %v1937 = vld [vmem:[%s5 + $0x18] sm:$0xff]
        %v1938 = vld [vmem:[%s5 + $0x20] sm:$0xff]
        %v1939 = vld [vmem:[%s5 + $0x28] sm:$0xff]
        %v1940 = vld [vmem:[%s5 + $0x30] sm:$0xff]
        %v1941 = vld [vmem:[%s5 + $0x38] sm:$0xff]
        %v1942 = vld [vmem:[%s6] sm:$0x1]
        %v1944 = vlaneseq
        %v1945 = vshrl.u32 %v1944, 7
        %v1946 = vsub.s32 0, %v1945
        %v1947 = vrot.slane %v1942, %v1946
        %v1950 = vsel %vm463, %v1918, 0
        %v1953 = vsel %vm463, %v1919, 0
        %v1956 = vsel %vm463, %v1920, 0
        %v1959 = vsel %vm463, %v1921, 0
        %v1962 = vsel %vm463, %v1922, 0
        %v1965 = vsel %vm463, %v1923, 0
        %v1968 = vsel %vm463, %v1924, 0
        %v1971 = vsel %vm463, %v1925, 0
        %v1974 = vsel %vm463, %v1926, 0
        %v1977 = vsel %vm463, %v1927, 0
        %v1980 = vsel %vm463, %v1928, 0
        %v1983 = vsel %vm463, %v1929, 0
        %v1986 = vsel %vm463, %v1930, 0
        %v1989 = vsel %vm463, %v1931, 0
        %v1992 = vsel %vm463, %v1932, 0
        %v1995 = vsel %vm463, %v1933, 0
        %1997 = vmatprep.subr.mxu0 0.0
        %1998 = vmatpush1.msra.mxu0 %v1934
        %1999 = vmatprep.subr.mxu0 0.0
        %2000 = vmatpush1.msra.mxu0 %v1935
        %2001 = vmatprep.subr.mxu0 0.0
        %2002 = vmatpush1.msra.mxu0 %v1936
        %2003 = vmatprep.subr.mxu0 0.0
        %2004 = vmatpush1.msra.mxu0 %v1937
        %2005 = vmatprep.subr.mxu0 0.0
        %2006 = vmatpush1.msra.mxu0 %v1938
        %2007 = vmatprep.subr.mxu0 0.0
        %2008 = vmatpush1.msra.mxu0 %v1939
        %2009 = vmatprep.subr.mxu0 0.0
        %2010 = vmatpush1.msra.mxu0 %v1940
        %2011 = vmatprep.subr.mxu0 0.0
        %2012 = vmatpush1.msra.mxu0 %v1941
        %2013 = vmatprep.subr.mxu0 0.0
        %2014 = vmatpush1.msra.mxu0 0.0
        %2015 = vmatprep.subr.mxu0 0.0
        %2016 = vmatpush1.msra.mxu0 0.0
        %2017 = vmatprep.subr.mxu0 0.0
        %2018 = vmatpush1.msra.mxu0 0.0
        %2019 = vmatprep.subr.mxu0 0.0
        %2020 = vmatpush1.msra.mxu0 0.0
        %2021 = vmatprep.subr.mxu0 0.0
        %2022 = vmatpush1.msra.mxu0 0.0
        %2023 = vmatprep.subr.mxu0 0.0
        %2024 = vmatpush1.msra.mxu0 0.0
        %2025 = vmatprep.subr.mxu0 0.0
        %2026 = vmatpush1.msra.mxu0 0.0
        %2027 = vmatprep.subr.mxu0 0.0
        %2028 = vmatpush1.msra.mxu0 0.0
        %2029 = vmatprep.subr.mxu0 0.0
        %2030 = vmatpush1.msra.mxu0 0.0
        %2031 = vmatprep.subr.mxu0 0.0
        %2032 = vmatpush1.msra.mxu0 0.0
        %2033 = vmatprep.subr.mxu0 0.0
        %2034 = vmatpush1.msra.mxu0 0.0
        %2035 = vmatprep.subr.mxu0 0.0
        %2036 = vmatpush1.msra.mxu0 0.0
        %2037 = vmatprep.subr.mxu0 0.0
        %2038 = vmatpush1.msra.mxu0 0.0
        %2039 = vmatprep.subr.mxu0 0.0
        %2040 = vmatpush1.msra.mxu0 0.0
        %2041 = vmatprep.subr.mxu0 0.0
        %2042 = vmatpush1.msra.mxu0 0.0
        %2043 = vmatprep.subr.mxu0 0.0
        %2044 = vmatpush1.msra.mxu0 0.0
        %2045 = vmatprep.subr.mxu0 0.0
        %2046 = vmatpush1.msra.mxu0 0.0
        %2047 = vmatprep.subr.mxu0 0.0
        %2048 = vmatpush1.msra.mxu0 0.0
        %2049 = vmatprep.subr.mxu0 0.0
        %2050 = vmatpush1.msra.mxu0 0.0
        %2051 = vmatprep.subr.mxu0 0.0
        %2052 = vmatpush1.msra.mxu0 0.0
        %2053 = vmatprep.subr.mxu0 0.0
        %2054 = vmatpush1.msra.mxu0 0.0
        %2055 = vmatprep.subr.mxu0 0.0
        %2056 = vmatpush1.msra.mxu0 0.0
        %2057 = vmatprep.subr.mxu0 0.0
        %2058 = vmatpush1.msra.mxu0 0.0
        %2059 = vmatprep.subr.mxu0 0.0
        %2060 = vmatpush1.msra.mxu0 0.0
        %2061 = vmatprep.mubr.f32.mxu0 0.0
        %2062 = vmatmul.mubr.f32.gmra.mrb[0].mxu0 %v1950
        %v2063 = vpop.f32.mrb[0].mxu0
        %v2064 = vadd.f32 %v1947, %v2063
        %v2065 = vpop.f32.mrb[0].mxu0
        %2066 = vmatprep.mubr.f32.mxu0 0.0
        %2067 = vmatmul.mubr.f32.gmra.mrb[0].mxu0 %v1953
        %v2068 = vpop.f32.mrb[0].mxu0
        %v2069 = vadd.f32 %v1947, %v2068
        %v2070 = vpop.f32.mrb[0].mxu0
        %2071 = vmatprep.mubr.f32.mxu0 0.0
        %2072 = vmatmul.mubr.f32.gmra.mrb[0].mxu0 %v1956
        %v2073 = vpop.f32.mrb[0].mxu0
        %v2074 = vadd.f32 %v1947, %v2073
        %v2075 = vpop.f32.mrb[0].mxu0
        %2076 = vmatprep.mubr.f32.mxu0 0.0
        %2077 = vmatmul.mubr.f32.gmra.mrb[0].mxu0 %v1959
        %v2078 = vpop.f32.mrb[0].mxu0
        %v2079 = vadd.f32 %v1947, %v2078
        %v2080 = vpop.f32.mrb[0].mxu0
        %2081 = vmatprep.mubr.f32.mxu0 0.0
        %2082 = vmatmul.mubr.f32.gmra.mrb[0].mxu0 %v1962
        %v2083 = vpop.f32.mrb[0].mxu0
        %v2084 = vadd.f32 %v1947, %v2083
        %v2085 = vpop.f32.mrb[0].mxu0
        %2086 = vmatprep.mubr.f32.mxu0 0.0
        %2087 = vmatmul.mubr.f32.gmra.mrb[0].mxu0 %v1965
        %v2088 = vpop.f32.mrb[0].mxu0
        %v2089 = vadd.f32 %v1947, %v2088
        %v2090 = vpop.f32.mrb[0].mxu0
        %2091 = vmatprep.mubr.f32.mxu0 0.0
        %2092 = vmatmul.mubr.f32.gmra.mrb[0].mxu0 %v1968
        %v2093 = vpop.f32.mrb[0].mxu0
        %v2094 = vadd.f32 %v1947, %v2093
        %v2095 = vpop.f32.mrb[0].mxu0
        %2096 = vmatprep.mubr.f32.mxu0 0.0
        %2097 = vmatmul.mubr.f32.gmra.mrb[0].mxu0 %v1971
        %v2098 = vpop.f32.mrb[0].mxu0
        %v2099 = vadd.f32 %v1947, %v2098
        %v2100 = vpop.f32.mrb[0].mxu0
        %2101 = vmatprep.mubr.f32.mxu0 0.0
        %2102 = vmatmul.mubr.f32.gmra.mrb[0].mxu0 %v1974
        %v2103 = vpop.f32.mrb[0].mxu0
        %v2104 = vadd.f32 %v1947, %v2103
        %v2105 = vpop.f32.mrb[0].mxu0
        %2106 = vmatprep.mubr.f32.mxu0 0.0
        %2107 = vmatmul.mubr.f32.gmra.mrb[0].mxu0 %v1977
        %v2108 = vpop.f32.mrb[0].mxu0
        %v2109 = vadd.f32 %v1947, %v2108
        %v2110 = vpop.f32.mrb[0].mxu0
        %2111 = vmatprep.mubr.f32.mxu0 0.0
        %2112 = vmatmul.mubr.f32.gmra.mrb[0].mxu0 %v1980
        %v2113 = vpop.f32.mrb[0].mxu0
        %v2114 = vadd.f32 %v1947, %v2113
        %v2115 = vpop.f32.mrb[0].mxu0
        %2116 = vmatprep.mubr.f32.mxu0 0.0
        %2117 = vmatmul.mubr.f32.gmra.mrb[0].mxu0 %v1983
        %v2118 = vpop.f32.mrb[0].mxu0
        %v2119 = vadd.f32 %v1947, %v2118
        %v2120 = vpop.f32.mrb[0].mxu0
        %2121 = vmatprep.mubr.f32.mxu0 0.0
        %2122 = vmatmul.mubr.f32.gmra.mrb[0].mxu0 %v1986
        %v2123 = vpop.f32.mrb[0].mxu0
        %v2124 = vadd.f32 %v1947, %v2123
        %v2125 = vpop.f32.mrb[0].mxu0
        %2126 = vmatprep.mubr.f32.mxu0 0.0
        %2127 = vmatmul.mubr.f32.gmra.mrb[0].mxu0 %v1989
        %v2128 = vpop.f32.mrb[0].mxu0
        %v2129 = vadd.f32 %v1947, %v2128
        %v2130 = vpop.f32.mrb[0].mxu0
        %2131 = vmatprep.mubr.f32.mxu0 0.0
        %2132 = vmatmul.mubr.f32.gmra.mrb[0].mxu0 %v1992
        %v2133 = vpop.f32.mrb[0].mxu0
        %v2134 = vadd.f32 %v1947, %v2133
        %v2135 = vpop.f32.mrb[0].mxu0
        %2136 = vmatprep.mubr.f32.mxu0 0.0
        %2137 = vmatmul.mubr.f32.gmra.mrb[0].mxu0 %v1995
        %v2138 = vpop.f32.mrb[0].mxu0
        %v2139 = vadd.f32 %v1947, %v2138
        %v2140 = vpop.f32.mrb[0].mxu0
        %2141 = vdwg.mxu0
        %v2142 = vmul.f32 %v2064, 0.1
        %v2143 = vmul.f32 %v2069, 0.1
        %v2144 = vmul.f32 %v2074, 0.1
        %v2145 = vmul.f32 %v2079, 0.1
        %v2146 = vmul.f32 %v2084, 0.1
        %v2147 = vmul.f32 %v2089, 0.1
        %v2148 = vmul.f32 %v2094, 0.1
        %v2149 = vmul.f32 %v2099, 0.1
        %v2150 = vmul.f32 %v2104, 0.1
        %v2151 = vmul.f32 %v2109, 0.1
        %v2152 = vmul.f32 %v2114, 0.1
        %v2153 = vmul.f32 %v2119, 0.1
        %v2154 = vmul.f32 %v2124, 0.1
        %v2155 = vmul.f32 %v2129, 0.1
        %v2156 = vmul.f32 %v2134, 0.1
        %v2157 = vmul.f32 %v2139, 0.1
        %v2158 = vmax.f32 %v2064, %v2142
        %v2159 = vmax.f32 %v2069, %v2143
        %v2160 = vmax.f32 %v2074, %v2144
        %v2161 = vmax.f32 %v2079, %v2145
        %v2162 = vmax.f32 %v2084, %v2146
        %v2163 = vmax.f32 %v2089, %v2147
        %v2164 = vmax.f32 %v2094, %v2148
        %v2165 = vmax.f32 %v2099, %v2149
        %v2166 = vmax.f32 %v2104, %v2150
        %v2167 = vmax.f32 %v2109, %v2151
        %v2168 = vmax.f32 %v2114, %v2152
        %v2169 = vmax.f32 %v2119, %v2153
        %v2170 = vmax.f32 %v2124, %v2154
        %v2171 = vmax.f32 %v2129, %v2155
        %v2172 = vmax.f32 %v2134, %v2156
        %v2173 = vmax.f32 %v2139, %v2157
        %v2174 = vmax.f32 %v2158, %v2162
        %v2175 = vmax.f32 %v2159, %v2163
        %v2176 = vmax.f32 %v2160, %v2164
        %v2177 = vmax.f32 %v2161, %v2165
        %v2178 = vmax.f32 %v2166, %v2170
        %v2179 = vmax.f32 %v2167, %v2171
        %v2180 = vmax.f32 %v2168, %v2172
        %v2181 = vmax.f32 %v2169, %v2173
        %v2182 = vmax.f32 %v2174, %v2178
        %v2183 = vmax.f32 %v2175, %v2179
        %v2184 = vmax.f32 %v2176, %v2180
        %v2185 = vmax.f32 %v2177, %v2181
        %v2186 = vld [vmem:[%s7] sm:$0xff]
        %v2187 = vld [vmem:[%s7 + $0x8] sm:$0xff]
        %v2188 = vld [vmem:[%s7 + $0x10] sm:$0xff]
        %v2189 = vld [vmem:[%s7 + $0x18] sm:$0xff]
        %v2190 = vld [vmem:[%s7 + $0x20] sm:$0xff]
        %v2191 = vld [vmem:[%s7 + $0x28] sm:$0xff]
        %v2192 = vld [vmem:[%s7 + $0x30] sm:$0xff]
        %v2193 = vld [vmem:[%s7 + $0x38] sm:$0xff]
        %v2194 = vld [vmem:[%s7 + $0x40] sm:$0xff]
        %v2195 = vld [vmem:[%s7 + $0x48] sm:$0xff]
        %v2196 = vld [vmem:[%s7 + $0x50] sm:$0xff]
        %v2197 = vld [vmem:[%s7 + $0x58] sm:$0xff]
        %v2198 = vld [vmem:[%s7 + $0x60] sm:$0xff]
        %v2199 = vld [vmem:[%s7 + $0x68] sm:$0xff]
        %v2200 = vld [vmem:[%s7 + $0x70] sm:$0xff]
        %v2201 = vld [vmem:[%s7 + $0x78] sm:$0xff]
        %v2202 = vld [vmem:[%s7 + $0x80] sm:$0xff]
        %v2203 = vld [vmem:[%s7 + $0x88] sm:$0xff]
        %v2204 = vld [vmem:[%s7 + $0x90] sm:$0xff]
        %v2205 = vld [vmem:[%s7 + $0x98] sm:$0xff]
        %v2206 = vld [vmem:[%s7 + $0xa0] sm:$0xff]
        %v2207 = vld [vmem:[%s7 + $0xa8] sm:$0xff]
        %v2208 = vld [vmem:[%s7 + $0xb0] sm:$0xff]
        %v2209 = vld [vmem:[%s7 + $0xb8] sm:$0xff]
        %v2210 = vld [vmem:[%s7 + $0xc0] sm:$0xff]
        %v2211 = vld [vmem:[%s7 + $0xc8] sm:$0xff]
        %v2212 = vld [vmem:[%s7 + $0xd0] sm:$0xff]
        %v2213 = vld [vmem:[%s7 + $0xd8] sm:$0xff]
        %v2214 = vld [vmem:[%s7 + $0xe0] sm:$0xff]
        %v2215 = vld [vmem:[%s7 + $0xe8] sm:$0xff]
        %v2216 = vld [vmem:[%s7 + $0xf0] sm:$0xff]
        %v2217 = vld [vmem:[%s7 + $0xf8] sm:$0xff]
        %v2218 = vld [vmem:[%s8] sm:$0x3]
        %v2220 = vlaneseq
        %v2221 = vshrl.u32 %v2220, 7
        %v2222 = vsub.s32 0, %v2221
        %v2223 = vrot.slane %v2218, %v2222
        %v2224 = vlaneseq
        %v2225 = vshrl.u32 %v2224, 7
        %v2226 = vsub.s32 1, %v2225
        %v2227 = vrot.slane %v2218, %v2226
        %2230 = vmatprep.subr.mxu0 %v2187
        %2231 = vmatpush1.msra.mxu0 %v2186
        %2232 = vmatprep.subr.mxu0 %v2189
        %2233 = vmatpush1.msra.mxu0 %v2188
        %2234 = vmatprep.subr.mxu0 %v2191
        %2235 = vmatpush1.msra.mxu0 %v2190
        %2236 = vmatprep.subr.mxu0 %v2193
        %2237 = vmatpush1.msra.mxu0 %v2192
        %2238 = vmatprep.subr.mxu0 %v2195
        %2239 = vmatpush1.msra.mxu0 %v2194
        %2240 = vmatprep.subr.mxu0 %v2197
        %2241 = vmatpush1.msra.mxu0 %v2196
        %2242 = vmatprep.subr.mxu0 %v2199
        %2243 = vmatpush1.msra.mxu0 %v2198
        %2244 = vmatprep.subr.mxu0 %v2201
        %2245 = vmatpush1.msra.mxu0 %v2200
        %2246 = vmatprep.subr.mxu0 %v2203
        %2247 = vmatpush1.msra.mxu0 %v2202
        %2248 = vmatprep.subr.mxu0 %v2205
        %2249 = vmatpush1.msra.mxu0 %v2204
        %2250 = vmatprep.subr.mxu0 %v2207
        %2251 = vmatpush1.msra.mxu0 %v2206
        %2252 = vmatprep.subr.mxu0 %v2209
        %2253 = vmatpush1.msra.mxu0 %v2208
        %2254 = vmatprep.subr.mxu0 %v2211
        %2255 = vmatpush1.msra.mxu0 %v2210
        %2256 = vmatprep.subr.mxu0 %v2213
        %2257 = vmatpush1.msra.mxu0 %v2212
        %2258 = vmatprep.subr.mxu0 %v2215
        %2259 = vmatpush1.msra.mxu0 %v2214
        %2260 = vmatprep.subr.mxu0 %v2217
        %2261 = vmatpush1.msra.mxu0 %v2216
        %2262 = vmatprep.subr.mxu0 0.0
        %2263 = vmatpush1.msra.mxu0 0.0
        %2264 = vmatprep.subr.mxu0 0.0
        %2265 = vmatpush1.msra.mxu0 0.0
        %2266 = vmatprep.subr.mxu0 0.0
        %2267 = vmatpush1.msra.mxu0 0.0
        %2268 = vmatprep.subr.mxu0 0.0
        %2269 = vmatpush1.msra.mxu0 0.0
        %2270 = vmatprep.subr.mxu0 0.0
        %2271 = vmatpush1.msra.mxu0 0.0
        %2272 = vmatprep.subr.mxu0 0.0
        %2273 = vmatpush1.msra.mxu0 0.0
        %2274 = vmatprep.subr.mxu0 0.0
        %2275 = vmatpush1.msra.mxu0 0.0
        %2276 = vmatprep.subr.mxu0 0.0
        %2277 = vmatpush1.msra.mxu0 0.0
        %2278 = vmatprep.subr.mxu0 0.0
        %2279 = vmatpush1.msra.mxu0 0.0
        %2280 = vmatprep.subr.mxu0 0.0
        %2281 = vmatpush1.msra.mxu0 0.0
        %2282 = vmatprep.subr.mxu0 0.0
        %2283 = vmatpush1.msra.mxu0 0.0
        %2284 = vmatprep.subr.mxu0 0.0
        %2285 = vmatpush1.msra.mxu0 0.0
        %2286 = vmatprep.subr.mxu0 0.0
        %2287 = vmatpush1.msra.mxu0 0.0
        %2288 = vmatprep.subr.mxu0 0.0
        %2289 = vmatpush1.msra.mxu0 0.0
        %2290 = vmatprep.subr.mxu0 0.0
        %2291 = vmatpush1.msra.mxu0 0.0
        %2292 = vmatprep.subr.mxu0 0.0
        %2293 = vmatpush1.msra.mxu0 0.0
        %2294 = vmatprep.mubr.f32.mxu0 0.0
        %2295 = vmatmul.mubr.f32.gmra.mrb[0].mxu0 %v2182
        %v2296 = vpop.f32.mrb[0].mxu0
        %v2297 = vadd.f32 %v2223, %v2296
        %v2298 = vpop.f32.mrb[0].mxu0
        %v2299 = vadd.f32 %v2227, %v2298
        %2300 = vmatprep.mubr.f32.mxu0 0.0
        %2301 = vmatmul.mubr.f32.gmra.mrb[0].mxu0 %v2183
        %v2302 = vpop.f32.mrb[0].mxu0
        %v2303 = vadd.f32 %v2223, %v2302
        %v2304 = vpop.f32.mrb[0].mxu0
        %v2305 = vadd.f32 %v2227, %v2304
        %2306 = vmatprep.mubr.f32.mxu0 0.0
        %2307 = vmatmul.mubr.f32.gmra.mrb[0].mxu0 %v2184
        %v2308 = vpop.f32.mrb[0].mxu0
        %v2309 = vadd.f32 %v2223, %v2308
        %v2310 = vpop.f32.mrb[0].mxu0
        %v2311 = vadd.f32 %v2227, %v2310
        %2312 = vmatprep.mubr.f32.mxu0 0.0
        %2313 = vmatmul.mubr.f32.gmra.mrb[0].mxu0 %v2185
        %v2314 = vpop.f32.mrb[0].mxu0
        %v2315 = vadd.f32 %v2223, %v2314
        %v2316 = vpop.f32.mrb[0].mxu0
        %v2317 = vadd.f32 %v2227, %v2316
        %2318 = vdwg.mxu0
        %v2319 = vmul.f32 %v2297, 0.1
        %v2320 = vmul.f32 %v2299, 0.1
        %v2321 = vmul.f32 %v2303, 0.1
        %v2322 = vmul.f32 %v2305, 0.1
        %v2323 = vmul.f32 %v2309, 0.1
        %v2324 = vmul.f32 %v2311, 0.1
        %v2325 = vmul.f32 %v2315, 0.1
        %v2326 = vmul.f32 %v2317, 0.1
        %v2327 = vmax.f32 %v2297, %v2319
        %v2328 = vmax.f32 %v2299, %v2320
        %v2329 = vmax.f32 %v2303, %v2321
        %v2330 = vmax.f32 %v2305, %v2322
        %v2331 = vmax.f32 %v2309, %v2323
        %v2332 = vmax.f32 %v2311, %v2324
        %v2333 = vmax.f32 %v2315, %v2325
        %v2334 = vmax.f32 %v2317, %v2326
        %v2335 = vadd.f32 %v2327, %v2329
        %v2336 = vadd.f32 %v2335, %v2331
        %vm2337 = vcmask 1040384
        %v2338 = vsel %vm2337, %v2333, 0.0
        %v2339 = vadd.f32 %v2336, %v2338
        %v2340 = vrot.slane %v2339, 4
        %v2341 = vadd.f32 %v2339, %v2340
        %v2342 = vrot.slane %v2341, 2
        %v2343 = vadd.f32 %v2341, %v2342
        %v2344 = vrot.slane %v2343, 1
        %v2345 = vadd.f32 %v2343, %v2344
        %v2346 = vadd.f32 %v2328, %v2330
        %v2347 = vadd.f32 %v2346, %v2332
        %v2348 = vsel %vm2337, %v2334, 0.0
        %v2349 = vadd.f32 %v2347, %v2348
        %v2350 = vrot.slane %v2349, 4
        %v2351 = vadd.f32 %v2349, %v2350
        %v2352 = vrot.slane %v2351, 2
        %v2353 = vadd.f32 %v2351, %v2352
        %v2354 = vrot.slane %v2353, 1
        %v2355 = vadd.f32 %v2353, %v2354
        %v2356 = vmul.f32 %v2345, 0.04
        %v2357 = vmul.f32 %v2355, 0.04
        %v2358 = vld [vmem:[%s9] sm:$0xff]
        %v2359 = vld [vmem:[%s9 + $0x8] sm:$0xff]
        %v2360 = vld [vmem:[%s9 + $0x10] sm:$0xff]
        %v2361 = vld [vmem:[%s9 + $0x18] sm:$0xff]
        %v2362 = vld [vmem:[%s9 + $0x20] sm:$0xff]
        %v2363 = vld [vmem:[%s9 + $0x28] sm:$0xff]
        %v2364 = vld [vmem:[%s9 + $0x30] sm:$0xff]
        %v2365 = vld [vmem:[%s9 + $0x38] sm:$0xff]
        %v2366 = vld [vmem:[%s9 + $0x40] sm:$0xff]
        %v2367 = vld [vmem:[%s9 + $0x48] sm:$0xff]
        %v2368 = vld [vmem:[%s9 + $0x50] sm:$0xff]
        %v2369 = vld [vmem:[%s9 + $0x58] sm:$0xff]
        %v2370 = vld [vmem:[%s9 + $0x60] sm:$0xff]
        %v2371 = vld [vmem:[%s9 + $0x68] sm:$0xff]
        %v2372 = vld [vmem:[%s9 + $0x70] sm:$0xff]
        %v2373 = vld [vmem:[%s9 + $0x78] sm:$0xff]
        %v2374 = vld [vmem:[%s9 + $0x80] sm:$0xff]
        %v2375 = vld [vmem:[%s9 + $0x88] sm:$0xff]
        %v2376 = vld [vmem:[%s9 + $0x90] sm:$0xff]
        %v2377 = vld [vmem:[%s9 + $0x98] sm:$0xff]
        %v2378 = vld [vmem:[%s9 + $0xa0] sm:$0xff]
        %v2379 = vld [vmem:[%s9 + $0xa8] sm:$0xff]
        %v2380 = vld [vmem:[%s9 + $0xb0] sm:$0xff]
        %v2381 = vld [vmem:[%s9 + $0xb8] sm:$0xff]
        %v2382 = vld [vmem:[%s9 + $0xc0] sm:$0xff]
        %v2383 = vld [vmem:[%s9 + $0xc8] sm:$0xff]
        %v2384 = vld [vmem:[%s9 + $0xd0] sm:$0xff]
        %v2385 = vld [vmem:[%s9 + $0xd8] sm:$0xff]
        %v2386 = vld [vmem:[%s9 + $0xe0] sm:$0xff]
        %v2387 = vld [vmem:[%s9 + $0xe8] sm:$0xff]
        %v2388 = vld [vmem:[%s9 + $0xf0] sm:$0xff]
        %v2389 = vld [vmem:[%s9 + $0xf8] sm:$0xff]
        %v2390 = vld [vmem:[%s10] sm:$0x1]
        %2391 = vmatprep.subr.mxu0 0.0
        %2392 = vmatpush1.msra.mxu0 %v2358
        %2393 = vmatprep.subr.mxu0 0.0
        %2394 = vmatpush1.msra.mxu0 %v2359
        %2395 = vmatprep.subr.mxu0 0.0
        %2396 = vmatpush1.msra.mxu0 %v2360
        %2397 = vmatprep.subr.mxu0 0.0
        %2398 = vmatpush1.msra.mxu0 %v2361
        %2399 = vmatprep.subr.mxu0 0.0
        %2400 = vmatpush1.msra.mxu0 %v2362
        %2401 = vmatprep.subr.mxu0 0.0
        %2402 = vmatpush1.msra.mxu0 %v2363
        %2403 = vmatprep.subr.mxu0 0.0
        %2404 = vmatpush1.msra.mxu0 %v2364
        %2405 = vmatprep.subr.mxu0 0.0
        %2406 = vmatpush1.msra.mxu0 %v2365
        %2407 = vmatprep.subr.mxu0 0.0
        %2408 = vmatpush1.msra.mxu0 %v2366
        %2409 = vmatprep.subr.mxu0 0.0
        %2410 = vmatpush1.msra.mxu0 %v2367
        %2411 = vmatprep.subr.mxu0 0.0
        %2412 = vmatpush1.msra.mxu0 %v2368
        %2413 = vmatprep.subr.mxu0 0.0
        %2414 = vmatpush1.msra.mxu0 %v2369
        %2415 = vmatprep.subr.mxu0 0.0
        %2416 = vmatpush1.msra.mxu0 %v2370
        %2417 = vmatprep.subr.mxu0 0.0
        %2418 = vmatpush1.msra.mxu0 %v2371
        %2419 = vmatprep.subr.mxu0 0.0
        %2420 = vmatpush1.msra.mxu0 %v2372
        %2421 = vmatprep.subr.mxu0 0.0
        %2422 = vmatpush1.msra.mxu0 %v2373
        %2423 = vmatprep.subr.mxu0 0.0
        %2424 = vmatpush1.msra.mxu0 %v2374
        %2425 = vmatprep.subr.mxu0 0.0
        %2426 = vmatpush1.msra.mxu0 %v2375
        %2427 = vmatprep.subr.mxu0 0.0
        %2428 = vmatpush1.msra.mxu0 %v2376
        %2429 = vmatprep.subr.mxu0 0.0
        %2430 = vmatpush1.msra.mxu0 %v2377
        %2431 = vmatprep.subr.mxu0 0.0
        %2432 = vmatpush1.msra.mxu0 %v2378
        %2433 = vmatprep.subr.mxu0 0.0
        %2434 = vmatpush1.msra.mxu0 %v2379
        %2435 = vmatprep.subr.mxu0 0.0
        %2436 = vmatpush1.msra.mxu0 %v2380
        %2437 = vmatprep.subr.mxu0 0.0
        %2438 = vmatpush1.msra.mxu0 %v2381
        %2439 = vmatprep.subr.mxu0 0.0
        %2440 = vmatpush1.msra.mxu0 %v2382
        %2441 = vmatprep.subr.mxu0 0.0
        %2442 = vmatpush1.msra.mxu0 %v2383
        %2443 = vmatprep.subr.mxu0 0.0
        %2444 = vmatpush1.msra.mxu0 %v2384
        %2445 = vmatprep.subr.mxu0 0.0
        %2446 = vmatpush1.msra.mxu0 %v2385
        %2447 = vmatprep.subr.mxu0 0.0
        %2448 = vmatpush1.msra.mxu0 %v2386
        %2449 = vmatprep.subr.mxu0 0.0
        %2450 = vmatpush1.msra.mxu0 %v2387
        %2451 = vmatprep.subr.mxu0 0.0
        %2452 = vmatpush1.msra.mxu0 %v2388
        %2453 = vmatprep.subr.mxu0 0.0
        %2454 = vmatpush1.msra.mxu0 %v2389
        %2455 = vmatprep.mubr.f32.mxu0 %v2357
        %2456 = vmatmul.mubr.f32.gmra.mrb[0].mxu0 %v2356
        %v2457 = vpop.f32.mrb[0].mxu0
        %v2458 = vadd.f32 %v2390, %v2457
        %v2459 = vpop.f32.mrb[0].mxu0
        %2460 = vdwg.mxu0
        %v2461 = vmax.f32 %v2458, 0.0
        %vm2462 = vcmask 16384
        %v2463 = vsel %vm2462, %v2461, 0.0
        %2464 = vadd.xlane.f32.xlu0 %v2463
        %v2465 = vpop.xlane.xlu0 %2464
        %v2466 = vrcp.pop %v2465
        %v2467 = vmul.f32 %v2461, %v2466
        %2468 = vst.msk [vmem:[%s378] sm:$0x1] %vm2462, %v2467
        %s2469 = sand.u32 %s269, 1
        %s2470 = scalar_lea.sflag [#allocation3], %s2469
        %s2471 = sand.u32 %s269, 1
        %s2472 = scalar_lea.vmem [#allocation2], %s2471
        // Predicated region
        $region65: #{classifier_forward.1} parent=63 // pred_check
          %p2473 = pneg %p279
        $region66: #{classifier_forward.1} parent=63 // pred_check_branch
          %2475 = sbr.rel (%p2473) target = $region68
        $region67: #{classifier_forward.1} parent=63 // pred_region
          %s2477 = ssub.s32 16, 16
          %2478 = vsyncadd %s2470, %s2477
          %s2479 = smul.addr %s25, 16
          %s2480 = scalar_lea.hbm %s11, %s2479
          %s2482 = sshll.u32 %s2472, 4
          %s2483 = int_to_ptr.vmem [resolvable:$true] %s2482
          %2485 = dma.vmem_to_hbm [thread:$0]  %s2483, 16, %s2480, %s2470
        $region68: #{classifier_forward.1} parent=63 // pred_fallthru
          _
      $region64: #{classifier_forward.1} parent=5 // pred_fallthru
        _
      %p2486 = scmp.le.s32.totalorder 2, %s20
      // Predicated region
      $region69: #{classifier_forward.1} parent=5 // pred_check
        %p2487 = pneg %p2486
      $region70: #{classifier_forward.1} parent=5 // pred_check_branch
        %2489 = sbr.rel (%p2487) target = $region72
      $region71: #{classifier_forward.1} parent=5 // pred_region
        %s2490 = ssub.s32 %s20, 2
        // Predicated region
        $region73: #{classifier_forward.1} parent=71 // pred_check
          %p2491 = pneg %p285
        $region74: #{classifier_forward.1} parent=71 // pred_check_branch
          %2493 = sbr.rel (%p2491) target = $region76
        $region75: #{classifier_forward.1} parent=71 // pred_region
          %s2494 = sand.u32 %s270, 1
          %s2495 = scalar_lea.sflag [#allocation3], %s2494
          %s2496 = sand.u32 %s270, 1
          %s2497 = scalar_lea.vmem [#allocation2], %s2496
          %2498 = dma.done %s2495, 16
        $region76: #{classifier_forward.1} parent=71 // pred_fallthru
          _
      $region72: #{classifier_forward.1} parent=5 // pred_fallthru
        _
    $region6: #{classifier_forward.1} parent=1 // loop_footer
      %s24 = sadd.s32 1, %s20
    $region7: #{classifier_forward.1} parent=1 // loop_footer_branch
      %19 = sbr.rel target = $region3
    $region8: #{classifier_forward.1} parent=1 // loop_exit
      _
    %2499 = vsyncpa [#allocation3], 1
    %s2500 = scalar_lea.sflag [#allocation3], 1
    %2501 = vsyncpa %s2500, 1

</llo_original>
